<compile_context>
chip_gen: v5e
topology: v5e:2x2
jax: 0.10.0
libtpu: 0.0.40
codegen_flags: <defaults>
</compile_context>

<pallas_src>
import jax
import jax.numpy as jnp
from jax.experimental import pallas as pl
from jax.experimental.pallas import tpu as pltpu


# ---------------------------------------------------------------------------
# Fused Pallas kernel (wavefront over layer/time diagonals)
# ---------------------------------------------------------------------------

def make_fused_rnn_kernel(T, Bp, H, O, n_layers):
    """Kernel computing Linear(RNN(x)) entirely in VMEM.

    Ref order:
      x          : (T*Bp, D)  time-major, batch padded to Bp, bf16
      per layer l: W_ih^T (D_l, H) bf16, W_hh^T (H, H) bf16, bias (1, H) f32
      W_out^T    : (H, O) bf16
      b_out      : (1, O) f32
      o          : (T*Bp, O) f32 output
    """

    def kernel(*refs):
        x_ref = refs[0]
        layer_refs = refs[1:1 + 3 * n_layers]
        w_outT_ref = refs[1 + 3 * n_layers]
        b_out_ref = refs[2 + 3 * n_layers]
        o_ref = refs[3 + 3 * n_layers]

        # Loop-invariant weight loads, hoisted once.
        w_ihT = [layer_refs[3 * l + 0][...] for l in range(n_layers)]   # bf16
        w_hhT = [layer_refs[3 * l + 1][...] for l in range(n_layers)]   # bf16
        bias = [layer_refs[3 * l + 2][...] for l in range(n_layers)]    # f32
        w_outT = w_outT_ref[...]                                        # bf16
        b_out = b_out_ref[...]                                          # f32

        # Layer-0 input projection hoisted out of the recurrence:
        # one time-parallel (T*Bp, D) @ (D, H) matmul (+ combined bias).
        xp0 = (jnp.dot(x_ref[...], w_ihT[0],
                       preferred_element_type=jnp.float32)
               + bias[0])                                               # (T*Bp, H) f32

        h0 = jnp.zeros((Bp, H), jnp.float32)
        # h_out[l][t] = hidden of layer l at time t (f32), filled wavefront-order.
        h_out = [[None] * T for _ in range(n_layers)]

        # Wavefront: cell (l, t) depends on (l, t-1) and (l-1, t) only, so all
        # cells on a diagonal d = l + t are mutually independent -> up to
        # n_layers recurrence chains in flight per diagonal.
        for d in range(T + n_layers - 1):
            for l in range(max(0, d - T + 1), min(n_layers, d + 1)):
                t = d - l
                if l == 0:
                    pre = xp0[t * Bp:(t + 1) * Bp, :]                   # aligned (Bp, H)
                else:
                    pre = (jnp.dot(h_out[l - 1][t].astype(jnp.bfloat16),
                                   w_ihT[l],
                                   preferred_element_type=jnp.float32)
                           + bias[l])
                h_prev = h_out[l][t - 1] if t > 0 else h0
                h_new = jnp.tanh(
                    pre + jnp.dot(h_prev.astype(jnp.bfloat16), w_hhT[l],
                                  preferred_element_type=jnp.float32))  # f32
                h_out[l][t] = h_new
                if l == n_layers - 1:
                    # Linear head per timestep (off the recurrence critical
                    # path); aligned Bp-row store into the output slab.
                    y = (jnp.dot(h_new.astype(jnp.bfloat16), w_outT,
                                 preferred_element_type=jnp.float32)
                         + b_out)
                    o_ref[t * Bp:(t + 1) * Bp, :] = y.astype(o_ref.dtype)

    return kernel


# ---------------------------------------------------------------------------
# One-time parameter preprocessing (hoisted out of the forward call)
# ---------------------------------------------------------------------------

def prepare_params(params):
    layers = []
    for (w_ih, w_hh, b_ih, b_hh) in params["rnn"]:
        layers.append((
            jnp.asarray(w_ih.T, jnp.bfloat16),                 # (D_l, H)
            jnp.asarray(w_hh.T, jnp.bfloat16),                 # (H, H)
            (b_ih + b_hh).astype(jnp.float32)[None, :],        # (1, H)
        ))
    return {
        "layers": tuple(layers),
        "w_outT": jnp.asarray(params["w_out"].T, jnp.bfloat16),  # (H, O)
        "b_out": params["b_out"].astype(jnp.float32)[None, :],   # (1, O)
    }


# ---------------------------------------------------------------------------
# Jitted forward wrapper
# ---------------------------------------------------------------------------

@jax.jit
def rnn_forward(x_btd, prepped):
    B, T, D = x_btd.shape
    n_layers = len(prepped["layers"])
    H = prepped["layers"][0][1].shape[0]
    O = prepped["w_outT"].shape[1]
    Bp = ((B + 7) // 8) * 8                                    # pad batch to sublane tile

    # batch_first (B,T,D) -> time-major, batch-padded, flat (T*Bp, D) in bf16.
    x = jnp.transpose(x_btd, (1, 0, 2)).astype(jnp.bfloat16)
    x = jnp.pad(x, ((0, 0), (0, Bp - B), (0, 0)))
    x_flat = x.reshape(T * Bp, D)

    args = [x_flat]
    for (w_ihT, w_hhT, b) in prepped["layers"]:
        args += [w_ihT, w_hhT, b]
    args += [prepped["w_outT"], prepped["b_out"]]

    kernel = make_fused_rnn_kernel(T, Bp, H, O, n_layers)
    out_flat = pl.pallas_call(
        kernel,
        out_shape=jax.ShapeDtypeStruct((T * Bp, O), jnp.float32),
        in_specs=[pl.BlockSpec(memory_space=pltpu.MemorySpace.VMEM)
                  for _ in args],
        out_specs=pl.BlockSpec(memory_space=pltpu.MemorySpace.VMEM),
    )(*args)

    out = out_flat.reshape(T, Bp, O)[:, :B, :]                 # drop batch padding
    return jnp.transpose(out, (1, 0, 2))                       # (B, T, O)


# ---------------------------------------------------------------------------
# Parameter init (mimics PyTorch U(-1/sqrt(H), 1/sqrt(H)))
# ---------------------------------------------------------------------------

def init_params(key, inp_dim, hidden_dim, out_dim, layers):
    k = 1.0 / jnp.sqrt(jnp.float32(hidden_dim))
    params = {"rnn": []}
    for layer in range(layers):
        d_in = inp_dim if layer == 0 else hidden_dim
        key, k1, k2, k3, k4 = jax.random.split(key, 5)
        w_ih = jax.random.uniform(k1, (hidden_dim, d_in), jnp.float32, -k, k)
        w_hh = jax.random.uniform(k2, (hidden_dim, hidden_dim), jnp.float32, -k, k)
        b_ih = jax.random.uniform(k3, (hidden_dim,), jnp.float32, -k, k)
        b_hh = jax.random.uniform(k4, (hidden_dim,), jnp.float32, -k, k)
        params["rnn"].append((w_ih, w_hh, b_ih, b_hh))
    key, k1, k2 = jax.random.split(key, 3)
    params["w_out"] = jax.random.uniform(k1, (out_dim, hidden_dim), jnp.float32, -k, k)
    params["b_out"] = jax.random.uniform(k2, (out_dim,), jnp.float32, -k, k)
    return params


# ---------------------------------------------------------------------------
# Pure-JAX reference (matmul_dtype selects the operand precision path)
# ---------------------------------------------------------------------------

def rnn_forward_ref(x_btd, params, matmul_dtype=jnp.float32):
    x = jnp.transpose(x_btd, (1, 0, 2)).astype(jnp.float32)    # (T, B, D)
    for (w_ih, w_hh, b_ih, b_hh) in params["rnn"]:
        w_ihT = w_ih.T.astype(matmul_dtype)
        w_hhT = w_hh.T.astype(matmul_dtype)
        b = (b_ih + b_hh).astype(jnp.float32)
        h0 = jnp.zeros((x.shape[1], w_ih.shape[0]), jnp.float32)

        def step(h, xt, w_ihT=w_ihT, w_hhT=w_hhT, b=b):
            pre = (jnp.dot(xt.astype(matmul_dtype), w_ihT,
                           preferred_element_type=jnp.float32)
                   + jnp.dot(h.astype(matmul_dtype), w_hhT,
                             preferred_element_type=jnp.float32)
                   + b)
            h_new = jnp.tanh(pre)
            return h_new, h_new

        _, x = jax.lax.scan(step, h0, x)
    out = (jnp.dot(x.astype(matmul_dtype),
                   params["w_out"].T.astype(matmul_dtype),
                   preferred_element_type=jnp.float32)
           + params["b_out"])
    return jnp.transpose(out, (1, 0, 2))


# ---------------------------------------------------------------------------

if __name__ == "__main__":
    B, T = 2, 8
    inp_dim, hidden_dim, out_dim, layers = 16, 32, 8, 4

    key = jax.random.PRNGKey(0)
    key, pkey, xkey = jax.random.split(key, 3)
    params = init_params(pkey, inp_dim, hidden_dim, out_dim, layers)
    x = jax.random.normal(xkey, (B, T, inp_dim), jnp.float32)

    prepped = prepare_params(params)
    out = rnn_forward(x, prepped)
    out = jax.block_until_ready(out)
    assert out.shape == (B, T, out_dim), out.shape

    # Tight check vs a reference running the same bf16-operand / f32-accum path.
    ref_bf16 = rnn_forward_ref(x, params, matmul_dtype=jnp.bfloat16)
    err_bf16 = float(jnp.max(jnp.abs(out - ref_bf16)))
    assert err_bf16 < 5e-3, f"bf16-matched ref mismatch: {err_bf16}"

    # Loose sanity check vs the full-f32 reference (bf16 operand rounding only).
    ref_f32 = rnn_forward_ref(x, params, matmul_dtype=jnp.float32)
    err_f32 = float(jnp.max(jnp.abs(out - ref_f32)))
    assert err_f32 < 5e-2, f"f32 ref mismatch: {err_f32}"

    print("KERNEL_OK")
</pallas_src>

<mosaic_0001>
module attributes {stable_mosaic.version = 11 : i64} {
  func.func @kernel(%arg0: memref<64x16xbf16, #tpu.memory_space<vmem>>, %arg1: memref<16x32xbf16, #tpu.memory_space<vmem>>, %arg2: memref<32x32xbf16, #tpu.memory_space<vmem>>, %arg3: memref<1x32xf32, #tpu.memory_space<vmem>>, %arg4: memref<32x32xbf16, #tpu.memory_space<vmem>>, %arg5: memref<32x32xbf16, #tpu.memory_space<vmem>>, %arg6: memref<1x32xf32, #tpu.memory_space<vmem>>, %arg7: memref<32x32xbf16, #tpu.memory_space<vmem>>, %arg8: memref<32x32xbf16, #tpu.memory_space<vmem>>, %arg9: memref<1x32xf32, #tpu.memory_space<vmem>>, %arg10: memref<32x32xbf16, #tpu.memory_space<vmem>>, %arg11: memref<32x32xbf16, #tpu.memory_space<vmem>>, %arg12: memref<1x32xf32, #tpu.memory_space<vmem>>, %arg13: memref<32x8xbf16, #tpu.memory_space<vmem>>, %arg14: memref<1x8xf32, #tpu.memory_space<vmem>>, %arg15: memref<64x8xf32, #tpu.memory_space<vmem>>) attributes {dimension_semantics = [], scalar_prefetch = 0 : i64, scratch_operands = 0 : i64, tpu.core_type = #tpu.core_type<tc>} {
    %c0 = arith.constant 0 : index
    %c0_0 = arith.constant 0 : index
    %0 = vector.load %arg1[%c0, %c0_0] : memref<16x32xbf16, #tpu.memory_space<vmem>>, vector<16x32xbf16>
    %c0_1 = arith.constant 0 : index
    %c0_2 = arith.constant 0 : index
    %1 = vector.load %arg4[%c0_1, %c0_2] : memref<32x32xbf16, #tpu.memory_space<vmem>>, vector<32x32xbf16>
    %c0_3 = arith.constant 0 : index
    %c0_4 = arith.constant 0 : index
    %2 = vector.load %arg7[%c0_3, %c0_4] : memref<32x32xbf16, #tpu.memory_space<vmem>>, vector<32x32xbf16>
    %c0_5 = arith.constant 0 : index
    %c0_6 = arith.constant 0 : index
    %3 = vector.load %arg10[%c0_5, %c0_6] : memref<32x32xbf16, #tpu.memory_space<vmem>>, vector<32x32xbf16>
    %c0_7 = arith.constant 0 : index
    %c0_8 = arith.constant 0 : index
    %4 = vector.load %arg2[%c0_7, %c0_8] : memref<32x32xbf16, #tpu.memory_space<vmem>>, vector<32x32xbf16>
    %c0_9 = arith.constant 0 : index
    %c0_10 = arith.constant 0 : index
    %5 = vector.load %arg5[%c0_9, %c0_10] : memref<32x32xbf16, #tpu.memory_space<vmem>>, vector<32x32xbf16>
    %c0_11 = arith.constant 0 : index
    %c0_12 = arith.constant 0 : index
    %6 = vector.load %arg8[%c0_11, %c0_12] : memref<32x32xbf16, #tpu.memory_space<vmem>>, vector<32x32xbf16>
    %c0_13 = arith.constant 0 : index
    %c0_14 = arith.constant 0 : index
    %7 = vector.load %arg11[%c0_13, %c0_14] : memref<32x32xbf16, #tpu.memory_space<vmem>>, vector<32x32xbf16>
    %c0_15 = arith.constant 0 : index
    %c0_16 = arith.constant 0 : index
    %8 = vector.load %arg3[%c0_15, %c0_16] : memref<1x32xf32, #tpu.memory_space<vmem>>, vector<1x32xf32>
    %c0_17 = arith.constant 0 : index
    %c0_18 = arith.constant 0 : index
    %9 = vector.load %arg6[%c0_17, %c0_18] : memref<1x32xf32, #tpu.memory_space<vmem>>, vector<1x32xf32>
    %c0_19 = arith.constant 0 : index
    %c0_20 = arith.constant 0 : index
    %10 = vector.load %arg9[%c0_19, %c0_20] : memref<1x32xf32, #tpu.memory_space<vmem>>, vector<1x32xf32>
    %c0_21 = arith.constant 0 : index
    %c0_22 = arith.constant 0 : index
    %11 = vector.load %arg12[%c0_21, %c0_22] : memref<1x32xf32, #tpu.memory_space<vmem>>, vector<1x32xf32>
    %c0_23 = arith.constant 0 : index
    %c0_24 = arith.constant 0 : index
    %12 = vector.load %arg13[%c0_23, %c0_24] : memref<32x8xbf16, #tpu.memory_space<vmem>>, vector<32x8xbf16>
    %c0_25 = arith.constant 0 : index
    %c0_26 = arith.constant 0 : index
    %13 = vector.load %arg14[%c0_25, %c0_26] : memref<1x8xf32, #tpu.memory_space<vmem>>, vector<1x8xf32>
    %c0_27 = arith.constant 0 : index
    %c0_28 = arith.constant 0 : index
    %14 = vector.load %arg0[%c0_27, %c0_28] : memref<64x16xbf16, #tpu.memory_space<vmem>>, vector<64x16xbf16>
    %cst = arith.constant dense<0.000000e+00> : vector<64x32xf32>
    %15 = tpu.matmul %14, %0, %cst {dimension_numbers = #tpu.dot_dimension_numbers<[1], [0], [0], [1], [0, 0, 1, 1], [], []>} : vector<64x16xbf16>, vector<16x32xbf16>, vector<64x32xf32> -> vector<64x32xf32>
    %16 = vector.broadcast %8 : vector<1x32xf32> to vector<64x32xf32>
    %17 = arith.addf %15, %16 : vector<64x32xf32>
    %cst_29 = arith.constant 0.000000e+00 : f32
    %18 = vector.broadcast %cst_29 : f32 to vector<8x32xf32>
    %19 = vector.extract_strided_slice %17 {offsets = [0, 0], sizes = [8, 32], strides = [1, 1]} : vector<64x32xf32> to vector<8x32xf32>
    %20 = arith.truncf %18 : vector<8x32xf32> to vector<8x32xbf16>
    %cst_30 = arith.constant dense<0.000000e+00> : vector<8x32xf32>
    %21 = tpu.matmul %20, %4, %cst_30 {dimension_numbers = #tpu.dot_dimension_numbers<[1], [0], [0], [1], [0, 0, 1, 1], [], []>} : vector<8x32xbf16>, vector<32x32xbf16>, vector<8x32xf32> -> vector<8x32xf32>
    %22 = arith.addf %19, %21 : vector<8x32xf32>
    %23 = math.tanh %22 : vector<8x32xf32>
    %24 = vector.extract_strided_slice %17 {offsets = [8, 0], sizes = [8, 32], strides = [1, 1]} : vector<64x32xf32> to vector<8x32xf32>
    %25 = arith.truncf %23 : vector<8x32xf32> to vector<8x32xbf16>
    %cst_31 = arith.constant dense<0.000000e+00> : vector<8x32xf32>
    %26 = tpu.matmul %25, %4, %cst_31 {dimension_numbers = #tpu.dot_dimension_numbers<[1], [0], [0], [1], [0, 0, 1, 1], [], []>} : vector<8x32xbf16>, vector<32x32xbf16>, vector<8x32xf32> -> vector<8x32xf32>
    %27 = arith.addf %24, %26 : vector<8x32xf32>
    %28 = math.tanh %27 : vector<8x32xf32>
    %29 = arith.truncf %23 : vector<8x32xf32> to vector<8x32xbf16>
    %cst_32 = arith.constant dense<0.000000e+00> : vector<8x32xf32>
    %30 = tpu.matmul %29, %1, %cst_32 {dimension_numbers = #tpu.dot_dimension_numbers<[1], [0], [0], [1], [0, 0, 1, 1], [], []>} : vector<8x32xbf16>, vector<32x32xbf16>, vector<8x32xf32> -> vector<8x32xf32>
    %31 = vector.broadcast %9 : vector<1x32xf32> to vector<8x32xf32>
    %32 = arith.addf %30, %31 : vector<8x32xf32>
    %33 = arith.truncf %18 : vector<8x32xf32> to vector<8x32xbf16>
    %cst_33 = arith.constant dense<0.000000e+00> : vector<8x32xf32>
    %34 = tpu.matmul %33, %5, %cst_33 {dimension_numbers = #tpu.dot_dimension_numbers<[1], [0], [0], [1], [0, 0, 1, 1], [], []>} : vector<8x32xbf16>, vector<32x32xbf16>, vector<8x32xf32> -> vector<8x32xf32>
    %35 = arith.addf %32, %34 : vector<8x32xf32>
    %36 = math.tanh %35 : vector<8x32xf32>
    %37 = vector.extract_strided_slice %17 {offsets = [16, 0], sizes = [8, 32], strides = [1, 1]} : vector<64x32xf32> to vector<8x32xf32>
    %38 = arith.truncf %28 : vector<8x32xf32> to vector<8x32xbf16>
    %cst_34 = arith.constant dense<0.000000e+00> : vector<8x32xf32>
    %39 = tpu.matmul %38, %4, %cst_34 {dimension_numbers = #tpu.dot_dimension_numbers<[1], [0], [0], [1], [0, 0, 1, 1], [], []>} : vector<8x32xbf16>, vector<32x32xbf16>, vector<8x32xf32> -> vector<8x32xf32>
    %40 = arith.addf %37, %39 : vector<8x32xf32>
    %41 = math.tanh %40 : vector<8x32xf32>
    %42 = arith.truncf %28 : vector<8x32xf32> to vector<8x32xbf16>
    %cst_35 = arith.constant dense<0.000000e+00> : vector<8x32xf32>
    %43 = tpu.matmul %42, %1, %cst_35 {dimension_numbers = #tpu.dot_dimension_numbers<[1], [0], [0], [1], [0, 0, 1, 1], [], []>} : vector<8x32xbf16>, vector<32x32xbf16>, vector<8x32xf32> -> vector<8x32xf32>
    %44 = vector.broadcast %9 : vector<1x32xf32> to vector<8x32xf32>
    %45 = arith.addf %43, %44 : vector<8x32xf32>
    %46 = arith.truncf %36 : vector<8x32xf32> to vector<8x32xbf16>
    %cst_36 = arith.constant dense<0.000000e+00> : vector<8x32xf32>
    %47 = tpu.matmul %46, %5, %cst_36 {dimension_numbers = #tpu.dot_dimension_numbers<[1], [0], [0], [1], [0, 0, 1, 1], [], []>} : vector<8x32xbf16>, vector<32x32xbf16>, vector<8x32xf32> -> vector<8x32xf32>
    %48 = arith.addf %45, %47 : vector<8x32xf32>
    %49 = math.tanh %48 : vector<8x32xf32>
    %50 = arith.truncf %36 : vector<8x32xf32> to vector<8x32xbf16>
    %cst_37 = arith.constant dense<0.000000e+00> : vector<8x32xf32>
    %51 = tpu.matmul %50, %2, %cst_37 {dimension_numbers = #tpu.dot_dimension_numbers<[1], [0], [0], [1], [0, 0, 1, 1], [], []>} : vector<8x32xbf16>, vector<32x32xbf16>, vector<8x32xf32> -> vector<8x32xf32>
    %52 = vector.broadcast %10 : vector<1x32xf32> to vector<8x32xf32>
    %53 = arith.addf %51, %52 : vector<8x32xf32>
    %54 = arith.truncf %18 : vector<8x32xf32> to vector<8x32xbf16>
    %cst_38 = arith.constant dense<0.000000e+00> : vector<8x32xf32>
    %55 = tpu.matmul %54, %6, %cst_38 {dimension_numbers = #tpu.dot_dimension_numbers<[1], [0], [0], [1], [0, 0, 1, 1], [], []>} : vector<8x32xbf16>, vector<32x32xbf16>, vector<8x32xf32> -> vector<8x32xf32>
    %56 = arith.addf %53, %55 : vector<8x32xf32>
    %57 = math.tanh %56 : vector<8x32xf32>
    %58 = vector.extract_strided_slice %17 {offsets = [24, 0], sizes = [8, 32], strides = [1, 1]} : vector<64x32xf32> to vector<8x32xf32>
    %59 = arith.truncf %41 : vector<8x32xf32> to vector<8x32xbf16>
    %cst_39 = arith.constant dense<0.000000e+00> : vector<8x32xf32>
    %60 = tpu.matmul %59, %4, %cst_39 {dimension_numbers = #tpu.dot_dimension_numbers<[1], [0], [0], [1], [0, 0, 1, 1], [], []>} : vector<8x32xbf16>, vector<32x32xbf16>, vector<8x32xf32> -> vector<8x32xf32>
    %61 = arith.addf %58, %60 : vector<8x32xf32>
    %62 = math.tanh %61 : vector<8x32xf32>
    %63 = arith.truncf %41 : vector<8x32xf32> to vector<8x32xbf16>
    %cst_40 = arith.constant dense<0.000000e+00> : vector<8x32xf32>
    %64 = tpu.matmul %63, %1, %cst_40 {dimension_numbers = #tpu.dot_dimension_numbers<[1], [0], [0], [1], [0, 0, 1, 1], [], []>} : vector<8x32xbf16>, vector<32x32xbf16>, vector<8x32xf32> -> vector<8x32xf32>
    %65 = vector.broadcast %9 : vector<1x32xf32> to vector<8x32xf32>
    %66 = arith.addf %64, %65 : vector<8x32xf32>
    %67 = arith.truncf %49 : vector<8x32xf32> to vector<8x32xbf16>
    %cst_41 = arith.constant dense<0.000000e+00> : vector<8x32xf32>
    %68 = tpu.matmul %67, %5, %cst_41 {dimension_numbers = #tpu.dot_dimension_numbers<[1], [0], [0], [1], [0, 0, 1, 1], [], []>} : vector<8x32xbf16>, vector<32x32xbf16>, vector<8x32xf32> -> vector<8x32xf32>
    %69 = arith.addf %66, %68 : vector<8x32xf32>
    %70 = math.tanh %69 : vector<8x32xf32>
    %71 = arith.truncf %49 : vector<8x32xf32> to vector<8x32xbf16>
    %cst_42 = arith.constant dense<0.000000e+00> : vector<8x32xf32>
    %72 = tpu.matmul %71, %2, %cst_42 {dimension_numbers = #tpu.dot_dimension_numbers<[1], [0], [0], [1], [0, 0, 1, 1], [], []>} : vector<8x32xbf16>, vector<32x32xbf16>, vector<8x32xf32> -> vector<8x32xf32>
    %73 = vector.broadcast %10 : vector<1x32xf32> to vector<8x32xf32>
    %74 = arith.addf %72, %73 : vector<8x32xf32>
    %75 = arith.truncf %57 : vector<8x32xf32> to vector<8x32xbf16>
    %cst_43 = arith.constant dense<0.000000e+00> : vector<8x32xf32>
    %76 = tpu.matmul %75, %6, %cst_43 {dimension_numbers = #tpu.dot_dimension_numbers<[1], [0], [0], [1], [0, 0, 1, 1], [], []>} : vector<8x32xbf16>, vector<32x32xbf16>, vector<8x32xf32> -> vector<8x32xf32>
    %77 = arith.addf %74, %76 : vector<8x32xf32>
    %78 = math.tanh %77 : vector<8x32xf32>
    %79 = arith.truncf %57 : vector<8x32xf32> to vector<8x32xbf16>
    %cst_44 = arith.constant dense<0.000000e+00> : vector<8x32xf32>
    %80 = tpu.matmul %79, %3, %cst_44 {dimension_numbers = #tpu.dot_dimension_numbers<[1], [0], [0], [1], [0, 0, 1, 1], [], []>} : vector<8x32xbf16>, vector<32x32xbf16>, vector<8x32xf32> -> vector<8x32xf32>
    %81 = vector.broadcast %11 : vector<1x32xf32> to vector<8x32xf32>
    %82 = arith.addf %80, %81 : vector<8x32xf32>
    %83 = arith.truncf %18 : vector<8x32xf32> to vector<8x32xbf16>
    %cst_45 = arith.constant dense<0.000000e+00> : vector<8x32xf32>
    %84 = tpu.matmul %83, %7, %cst_45 {dimension_numbers = #tpu.dot_dimension_numbers<[1], [0], [0], [1], [0, 0, 1, 1], [], []>} : vector<8x32xbf16>, vector<32x32xbf16>, vector<8x32xf32> -> vector<8x32xf32>
    %85 = arith.addf %82, %84 : vector<8x32xf32>
    %86 = math.tanh %85 : vector<8x32xf32>
    %87 = arith.truncf %86 : vector<8x32xf32> to vector<8x32xbf16>
    %cst_46 = arith.constant dense<0.000000e+00> : vector<8x8xf32>
    %88 = tpu.matmul %87, %12, %cst_46 {dimension_numbers = #tpu.dot_dimension_numbers<[1], [0], [0], [1], [0, 0, 1, 1], [], []>} : vector<8x32xbf16>, vector<32x8xbf16>, vector<8x8xf32> -> vector<8x8xf32>
    %89 = vector.broadcast %13 : vector<1x8xf32> to vector<8x8xf32>
    %90 = arith.addf %88, %89 : vector<8x8xf32>
    %c0_47 = arith.constant 0 : index
    %c0_48 = arith.constant 0 : index
    %91 = vector.load %arg15[%c0_47, %c0_48] : memref<64x8xf32, #tpu.memory_space<vmem>>, vector<8x8xf32>
    tpu.vector_store %arg15[%c0_47, %c0_48], %90 {strides = array<i32>} : memref<64x8xf32, #tpu.memory_space<vmem>>, vector<8x8xf32>,
    %92 = vector.extract_strided_slice %17 {offsets = [32, 0], sizes = [8, 32], strides = [1, 1]} : vector<64x32xf32> to vector<8x32xf32>
    %93 = arith.truncf %62 : vector<8x32xf32> to vector<8x32xbf16>
    %cst_49 = arith.constant dense<0.000000e+00> : vector<8x32xf32>
    %94 = tpu.matmul %93, %4, %cst_49 {dimension_numbers = #tpu.dot_dimension_numbers<[1], [0], [0], [1], [0, 0, 1, 1], [], []>} : vector<8x32xbf16>, vector<32x32xbf16>, vector<8x32xf32> -> vector<8x32xf32>
    %95 = arith.addf %92, %94 : vector<8x32xf32>
    %96 = math.tanh %95 : vector<8x32xf32>
    %97 = arith.truncf %62 : vector<8x32xf32> to vector<8x32xbf16>
    %cst_50 = arith.constant dense<0.000000e+00> : vector<8x32xf32>
    %98 = tpu.matmul %97, %1, %cst_50 {dimension_numbers = #tpu.dot_dimension_numbers<[1], [0], [0], [1], [0, 0, 1, 1], [], []>} : vector<8x32xbf16>, vector<32x32xbf16>, vector<8x32xf32> -> vector<8x32xf32>
    %99 = vector.broadcast %9 : vector<1x32xf32> to vector<8x32xf32>
    %100 = arith.addf %98, %99 : vector<8x32xf32>
    %101 = arith.truncf %70 : vector<8x32xf32> to vector<8x32xbf16>
    %cst_51 = arith.constant dense<0.000000e+00> : vector<8x32xf32>
    %102 = tpu.matmul %101, %5, %cst_51 {dimension_numbers = #tpu.dot_dimension_numbers<[1], [0], [0], [1], [0, 0, 1, 1], [], []>} : vector<8x32xbf16>, vector<32x32xbf16>, vector<8x32xf32> -> vector<8x32xf32>
    %103 = arith.addf %100, %102 : vector<8x32xf32>
    %104 = math.tanh %103 : vector<8x32xf32>
    %105 = arith.truncf %70 : vector<8x32xf32> to vector<8x32xbf16>
    %cst_52 = arith.constant dense<0.000000e+00> : vector<8x32xf32>
    %106 = tpu.matmul %105, %2, %cst_52 {dimension_numbers = #tpu.dot_dimension_numbers<[1], [0], [0], [1], [0, 0, 1, 1], [], []>} : vector<8x32xbf16>, vector<32x32xbf16>, vector<8x32xf32> -> vector<8x32xf32>
    %107 = vector.broadcast %10 : vector<1x32xf32> to vector<8x32xf32>
    %108 = arith.addf %106, %107 : vector<8x32xf32>
    %109 = arith.truncf %78 : vector<8x32xf32> to vector<8x32xbf16>
    %cst_53 = arith.constant dense<0.000000e+00> : vector<8x32xf32>
    %110 = tpu.matmul %109, %6, %cst_53 {dimension_numbers = #tpu.dot_dimension_numbers<[1], [0], [0], [1], [0, 0, 1, 1], [], []>} : vector<8x32xbf16>, vector<32x32xbf16>, vector<8x32xf32> -> vector<8x32xf32>
    %111 = arith.addf %108, %110 : vector<8x32xf32>
    %112 = math.tanh %111 : vector<8x32xf32>
    %113 = arith.truncf %78 : vector<8x32xf32> to vector<8x32xbf16>
    %cst_54 = arith.constant dense<0.000000e+00> : vector<8x32xf32>
    %114 = tpu.matmul %113, %3, %cst_54 {dimension_numbers = #tpu.dot_dimension_numbers<[1], [0], [0], [1], [0, 0, 1, 1], [], []>} : vector<8x32xbf16>, vector<32x32xbf16>, vector<8x32xf32> -> vector<8x32xf32>
    %115 = vector.broadcast %11 : vector<1x32xf32> to vector<8x32xf32>
    %116 = arith.addf %114, %115 : vector<8x32xf32>
    %117 = arith.truncf %86 : vector<8x32xf32> to vector<8x32xbf16>
    %cst_55 = arith.constant dense<0.000000e+00> : vector<8x32xf32>
    %118 = tpu.matmul %117, %7, %cst_55 {dimension_numbers = #tpu.dot_dimension_numbers<[1], [0], [0], [1], [0, 0, 1, 1], [], []>} : vector<8x32xbf16>, vector<32x32xbf16>, vector<8x32xf32> -> vector<8x32xf32>
    %119 = arith.addf %116, %118 : vector<8x32xf32>
    %120 = math.tanh %119 : vector<8x32xf32>
    %121 = arith.truncf %120 : vector<8x32xf32> to vector<8x32xbf16>
    %cst_56 = arith.constant dense<0.000000e+00> : vector<8x8xf32>
    %122 = tpu.matmul %121, %12, %cst_56 {dimension_numbers = #tpu.dot_dimension_numbers<[1], [0], [0], [1], [0, 0, 1, 1], [], []>} : vector<8x32xbf16>, vector<32x8xbf16>, vector<8x8xf32> -> vector<8x8xf32>
    %123 = vector.broadcast %13 : vector<1x8xf32> to vector<8x8xf32>
    %124 = arith.addf %122, %123 : vector<8x8xf32>
    %c8 = arith.constant 8 : index
    %c0_57 = arith.constant 0 : index
    %125 = vector.load %arg15[%c8, %c0_57] : memref<64x8xf32, #tpu.memory_space<vmem>>, vector<8x8xf32>
    tpu.vector_store %arg15[%c8, %c0_57], %124 {strides = array<i32>} : memref<64x8xf32, #tpu.memory_space<vmem>>, vector<8x8xf32>,
    %126 = vector.extract_strided_slice %17 {offsets = [40, 0], sizes = [8, 32], strides = [1, 1]} : vector<64x32xf32> to vector<8x32xf32>
    %127 = arith.truncf %96 : vector<8x32xf32> to vector<8x32xbf16>
    %cst_58 = arith.constant dense<0.000000e+00> : vector<8x32xf32>
    %128 = tpu.matmul %127, %4, %cst_58 {dimension_numbers = #tpu.dot_dimension_numbers<[1], [0], [0], [1], [0, 0, 1, 1], [], []>} : vector<8x32xbf16>, vector<32x32xbf16>, vector<8x32xf32> -> vector<8x32xf32>
    %129 = arith.addf %126, %128 : vector<8x32xf32>
    %130 = math.tanh %129 : vector<8x32xf32>
    %131 = arith.truncf %96 : vector<8x32xf32> to vector<8x32xbf16>
    %cst_59 = arith.constant dense<0.000000e+00> : vector<8x32xf32>
    %132 = tpu.matmul %131, %1, %cst_59 {dimension_numbers = #tpu.dot_dimension_numbers<[1], [0], [0], [1], [0, 0, 1, 1], [], []>} : vector<8x32xbf16>, vector<32x32xbf16>, vector<8x32xf32> -> vector<8x32xf32>
    %133 = vector.broadcast %9 : vector<1x32xf32> to vector<8x32xf32>
    %134 = arith.addf %132, %133 : vector<8x32xf32>
    %135 = arith.truncf %104 : vector<8x32xf32> to vector<8x32xbf16>
    %cst_60 = arith.constant dense<0.000000e+00> : vector<8x32xf32>
    %136 = tpu.matmul %135, %5, %cst_60 {dimension_numbers = #tpu.dot_dimension_numbers<[1], [0], [0], [1], [0, 0, 1, 1], [], []>} : vector<8x32xbf16>, vector<32x32xbf16>, vector<8x32xf32> -> vector<8x32xf32>
    %137 = arith.addf %134, %136 : vector<8x32xf32>
    %138 = math.tanh %137 : vector<8x32xf32>
    %139 = arith.truncf %104 : vector<8x32xf32> to vector<8x32xbf16>
    %cst_61 = arith.constant dense<0.000000e+00> : vector<8x32xf32>
    %140 = tpu.matmul %139, %2, %cst_61 {dimension_numbers = #tpu.dot_dimension_numbers<[1], [0], [0], [1], [0, 0, 1, 1], [], []>} : vector<8x32xbf16>, vector<32x32xbf16>, vector<8x32xf32> -> vector<8x32xf32>
    %141 = vector.broadcast %10 : vector<1x32xf32> to vector<8x32xf32>
    %142 = arith.addf %140, %141 : vector<8x32xf32>
    %143 = arith.truncf %112 : vector<8x32xf32> to vector<8x32xbf16>
    %cst_62 = arith.constant dense<0.000000e+00> : vector<8x32xf32>
    %144 = tpu.matmul %143, %6, %cst_62 {dimension_numbers = #tpu.dot_dimension_numbers<[1], [0], [0], [1], [0, 0, 1, 1], [], []>} : vector<8x32xbf16>, vector<32x32xbf16>, vector<8x32xf32> -> vector<8x32xf32>
    %145 = arith.addf %142, %144 : vector<8x32xf32>
    %146 = math.tanh %145 : vector<8x32xf32>
    %147 = arith.truncf %112 : vector<8x32xf32> to vector<8x32xbf16>
    %cst_63 = arith.constant dense<0.000000e+00> : vector<8x32xf32>
    %148 = tpu.matmul %147, %3, %cst_63 {dimension_numbers = #tpu.dot_dimension_numbers<[1], [0], [0], [1], [0, 0, 1, 1], [], []>} : vector<8x32xbf16>, vector<32x32xbf16>, vector<8x32xf32> -> vector<8x32xf32>
    %149 = vector.broadcast %11 : vector<1x32xf32> to vector<8x32xf32>
    %150 = arith.addf %148, %149 : vector<8x32xf32>
    %151 = arith.truncf %120 : vector<8x32xf32> to vector<8x32xbf16>
    %cst_64 = arith.constant dense<0.000000e+00> : vector<8x32xf32>
    %152 = tpu.matmul %151, %7, %cst_64 {dimension_numbers = #tpu.dot_dimension_numbers<[1], [0], [0], [1], [0, 0, 1, 1], [], []>} : vector<8x32xbf16>, vector<32x32xbf16>, vector<8x32xf32> -> vector<8x32xf32>
    %153 = arith.addf %150, %152 : vector<8x32xf32>
    %154 = math.tanh %153 : vector<8x32xf32>
    %155 = arith.truncf %154 : vector<8x32xf32> to vector<8x32xbf16>
    %cst_65 = arith.constant dense<0.000000e+00> : vector<8x8xf32>
    %156 = tpu.matmul %155, %12, %cst_65 {dimension_numbers = #tpu.dot_dimension_numbers<[1], [0], [0], [1], [0, 0, 1, 1], [], []>} : vector<8x32xbf16>, vector<32x8xbf16>, vector<8x8xf32> -> vector<8x8xf32>
    %157 = vector.broadcast %13 : vector<1x8xf32> to vector<8x8xf32>
    %158 = arith.addf %156, %157 : vector<8x8xf32>
    %c16 = arith.constant 16 : index
    %c0_66 = arith.constant 0 : index
    %159 = vector.load %arg15[%c16, %c0_66] : memref<64x8xf32, #tpu.memory_space<vmem>>, vector<8x8xf32>
    tpu.vector_store %arg15[%c16, %c0_66], %158 {strides = array<i32>} : memref<64x8xf32, #tpu.memory_space<vmem>>, vector<8x8xf32>,
    %160 = vector.extract_strided_slice %17 {offsets = [48, 0], sizes = [8, 32], strides = [1, 1]} : vector<64x32xf32> to vector<8x32xf32>
    %161 = arith.truncf %130 : vector<8x32xf32> to vector<8x32xbf16>
    %cst_67 = arith.constant dense<0.000000e+00> : vector<8x32xf32>
    %162 = tpu.matmul %161, %4, %cst_67 {dimension_numbers = #tpu.dot_dimension_numbers<[1], [0], [0], [1], [0, 0, 1, 1], [], []>} : vector<8x32xbf16>, vector<32x32xbf16>, vector<8x32xf32> -> vector<8x32xf32>
    %163 = arith.addf %160, %162 : vector<8x32xf32>
    %164 = math.tanh %163 : vector<8x32xf32>
    %165 = arith.truncf %130 : vector<8x32xf32> to vector<8x32xbf16>
    %cst_68 = arith.constant dense<0.000000e+00> : vector<8x32xf32>
    %166 = tpu.matmul %165, %1, %cst_68 {dimension_numbers = #tpu.dot_dimension_numbers<[1], [0], [0], [1], [0, 0, 1, 1], [], []>} : vector<8x32xbf16>, vector<32x32xbf16>, vector<8x32xf32> -> vector<8x32xf32>
    %167 = vector.broadcast %9 : vector<1x32xf32> to vector<8x32xf32>
    %168 = arith.addf %166, %167 : vector<8x32xf32>
    %169 = arith.truncf %138 : vector<8x32xf32> to vector<8x32xbf16>
    %cst_69 = arith.constant dense<0.000000e+00> : vector<8x32xf32>
    %170 = tpu.matmul %169, %5, %cst_69 {dimension_numbers = #tpu.dot_dimension_numbers<[1], [0], [0], [1], [0, 0, 1, 1], [], []>} : vector<8x32xbf16>, vector<32x32xbf16>, vector<8x32xf32> -> vector<8x32xf32>
    %171 = arith.addf %168, %170 : vector<8x32xf32>
    %172 = math.tanh %171 : vector<8x32xf32>
    %173 = arith.truncf %138 : vector<8x32xf32> to vector<8x32xbf16>
    %cst_70 = arith.constant dense<0.000000e+00> : vector<8x32xf32>
    %174 = tpu.matmul %173, %2, %cst_70 {dimension_numbers = #tpu.dot_dimension_numbers<[1], [0], [0], [1], [0, 0, 1, 1], [], []>} : vector<8x32xbf16>, vector<32x32xbf16>, vector<8x32xf32> -> vector<8x32xf32>
    %175 = vector.broadcast %10 : vector<1x32xf32> to vector<8x32xf32>
    %176 = arith.addf %174, %175 : vector<8x32xf32>
    %177 = arith.truncf %146 : vector<8x32xf32> to vector<8x32xbf16>
    %cst_71 = arith.constant dense<0.000000e+00> : vector<8x32xf32>
    %178 = tpu.matmul %177, %6, %cst_71 {dimension_numbers = #tpu.dot_dimension_numbers<[1], [0], [0], [1], [0, 0, 1, 1], [], []>} : vector<8x32xbf16>, vector<32x32xbf16>, vector<8x32xf32> -> vector<8x32xf32>
    %179 = arith.addf %176, %178 : vector<8x32xf32>
    %180 = math.tanh %179 : vector<8x32xf32>
    %181 = arith.truncf %146 : vector<8x32xf32> to vector<8x32xbf16>
    %cst_72 = arith.constant dense<0.000000e+00> : vector<8x32xf32>
    %182 = tpu.matmul %181, %3, %cst_72 {dimension_numbers = #tpu.dot_dimension_numbers<[1], [0], [0], [1], [0, 0, 1, 1], [], []>} : vector<8x32xbf16>, vector<32x32xbf16>, vector<8x32xf32> -> vector<8x32xf32>
    %183 = vector.broadcast %11 : vector<1x32xf32> to vector<8x32xf32>
    %184 = arith.addf %182, %183 : vector<8x32xf32>
    %185 = arith.truncf %154 : vector<8x32xf32> to vector<8x32xbf16>
    %cst_73 = arith.constant dense<0.000000e+00> : vector<8x32xf32>
    %186 = tpu.matmul %185, %7, %cst_73 {dimension_numbers = #tpu.dot_dimension_numbers<[1], [0], [0], [1], [0, 0, 1, 1], [], []>} : vector<8x32xbf16>, vector<32x32xbf16>, vector<8x32xf32> -> vector<8x32xf32>
    %187 = arith.addf %184, %186 : vector<8x32xf32>
    %188 = math.tanh %187 : vector<8x32xf32>
    %189 = arith.truncf %188 : vector<8x32xf32> to vector<8x32xbf16>
    %cst_74 = arith.constant dense<0.000000e+00> : vector<8x8xf32>
    %190 = tpu.matmul %189, %12, %cst_74 {dimension_numbers = #tpu.dot_dimension_numbers<[1], [0], [0], [1], [0, 0, 1, 1], [], []>} : vector<8x32xbf16>, vector<32x8xbf16>, vector<8x8xf32> -> vector<8x8xf32>
    %191 = vector.broadcast %13 : vector<1x8xf32> to vector<8x8xf32>
    %192 = arith.addf %190, %191 : vector<8x8xf32>
    %c24 = arith.constant 24 : index
    %c0_75 = arith.constant 0 : index
    %193 = vector.load %arg15[%c24, %c0_75] : memref<64x8xf32, #tpu.memory_space<vmem>>, vector<8x8xf32>
    tpu.vector_store %arg15[%c24, %c0_75], %192 {strides = array<i32>} : memref<64x8xf32, #tpu.memory_space<vmem>>, vector<8x8xf32>,
    %194 = vector.extract_strided_slice %17 {offsets = [56, 0], sizes = [8, 32], strides = [1, 1]} : vector<64x32xf32> to vector<8x32xf32>
    %195 = arith.truncf %164 : vector<8x32xf32> to vector<8x32xbf16>
    %cst_76 = arith.constant dense<0.000000e+00> : vector<8x32xf32>
    %196 = tpu.matmul %195, %4, %cst_76 {dimension_numbers = #tpu.dot_dimension_numbers<[1], [0], [0], [1], [0, 0, 1, 1], [], []>} : vector<8x32xbf16>, vector<32x32xbf16>, vector<8x32xf32> -> vector<8x32xf32>
    %197 = arith.addf %194, %196 : vector<8x32xf32>
    %198 = math.tanh %197 : vector<8x32xf32>
    %199 = arith.truncf %164 : vector<8x32xf32> to vector<8x32xbf16>
    %cst_77 = arith.constant dense<0.000000e+00> : vector<8x32xf32>
    %200 = tpu.matmul %199, %1, %cst_77 {dimension_numbers = #tpu.dot_dimension_numbers<[1], [0], [0], [1], [0, 0, 1, 1], [], []>} : vector<8x32xbf16>, vector<32x32xbf16>, vector<8x32xf32> -> vector<8x32xf32>
    %201 = vector.broadcast %9 : vector<1x32xf32> to vector<8x32xf32>
    %202 = arith.addf %200, %201 : vector<8x32xf32>
    %203 = arith.truncf %172 : vector<8x32xf32> to vector<8x32xbf16>
    %cst_78 = arith.constant dense<0.000000e+00> : vector<8x32xf32>
    %204 = tpu.matmul %203, %5, %cst_78 {dimension_numbers = #tpu.dot_dimension_numbers<[1], [0], [0], [1], [0, 0, 1, 1], [], []>} : vector<8x32xbf16>, vector<32x32xbf16>, vector<8x32xf32> -> vector<8x32xf32>
    %205 = arith.addf %202, %204 : vector<8x32xf32>
    %206 = math.tanh %205 : vector<8x32xf32>
    %207 = arith.truncf %172 : vector<8x32xf32> to vector<8x32xbf16>
    %cst_79 = arith.constant dense<0.000000e+00> : vector<8x32xf32>
    %208 = tpu.matmul %207, %2, %cst_79 {dimension_numbers = #tpu.dot_dimension_numbers<[1], [0], [0], [1], [0, 0, 1, 1], [], []>} : vector<8x32xbf16>, vector<32x32xbf16>, vector<8x32xf32> -> vector<8x32xf32>
    %209 = vector.broadcast %10 : vector<1x32xf32> to vector<8x32xf32>
    %210 = arith.addf %208, %209 : vector<8x32xf32>
    %211 = arith.truncf %180 : vector<8x32xf32> to vector<8x32xbf16>
    %cst_80 = arith.constant dense<0.000000e+00> : vector<8x32xf32>
    %212 = tpu.matmul %211, %6, %cst_80 {dimension_numbers = #tpu.dot_dimension_numbers<[1], [0], [0], [1], [0, 0, 1, 1], [], []>} : vector<8x32xbf16>, vector<32x32xbf16>, vector<8x32xf32> -> vector<8x32xf32>
    %213 = arith.addf %210, %212 : vector<8x32xf32>
    %214 = math.tanh %213 : vector<8x32xf32>
    %215 = arith.truncf %180 : vector<8x32xf32> to vector<8x32xbf16>
    %cst_81 = arith.constant dense<0.000000e+00> : vector<8x32xf32>
    %216 = tpu.matmul %215, %3, %cst_81 {dimension_numbers = #tpu.dot_dimension_numbers<[1], [0], [0], [1], [0, 0, 1, 1], [], []>} : vector<8x32xbf16>, vector<32x32xbf16>, vector<8x32xf32> -> vector<8x32xf32>
    %217 = vector.broadcast %11 : vector<1x32xf32> to vector<8x32xf32>
    %218 = arith.addf %216, %217 : vector<8x32xf32>
    %219 = arith.truncf %188 : vector<8x32xf32> to vector<8x32xbf16>
    %cst_82 = arith.constant dense<0.000000e+00> : vector<8x32xf32>
    %220 = tpu.matmul %219, %7, %cst_82 {dimension_numbers = #tpu.dot_dimension_numbers<[1], [0], [0], [1], [0, 0, 1, 1], [], []>} : vector<8x32xbf16>, vector<32x32xbf16>, vector<8x32xf32> -> vector<8x32xf32>
    %221 = arith.addf %218, %220 : vector<8x32xf32>
    %222 = math.tanh %221 : vector<8x32xf32>
    %223 = arith.truncf %222 : vector<8x32xf32> to vector<8x32xbf16>
    %cst_83 = arith.constant dense<0.000000e+00> : vector<8x8xf32>
    %224 = tpu.matmul %223, %12, %cst_83 {dimension_numbers = #tpu.dot_dimension_numbers<[1], [0], [0], [1], [0, 0, 1, 1], [], []>} : vector<8x32xbf16>, vector<32x8xbf16>, vector<8x8xf32> -> vector<8x8xf32>
    %225 = vector.broadcast %13 : vector<1x8xf32> to vector<8x8xf32>
    %226 = arith.addf %224, %225 : vector<8x8xf32>
    %c32 = arith.constant 32 : index
    %c0_84 = arith.constant 0 : index
    %227 = vector.load %arg15[%c32, %c0_84] : memref<64x8xf32, #tpu.memory_space<vmem>>, vector<8x8xf32>
    tpu.vector_store %arg15[%c32, %c0_84], %226 {strides = array<i32>} : memref<64x8xf32, #tpu.memory_space<vmem>>, vector<8x8xf32>,
    %228 = arith.truncf %198 : vector<8x32xf32> to vector<8x32xbf16>
    %cst_85 = arith.constant dense<0.000000e+00> : vector<8x32xf32>
    %229 = tpu.matmul %228, %1, %cst_85 {dimension_numbers = #tpu.dot_dimension_numbers<[1], [0], [0], [1], [0, 0, 1, 1], [], []>} : vector<8x32xbf16>, vector<32x32xbf16>, vector<8x32xf32> -> vector<8x32xf32>
    %230 = vector.broadcast %9 : vector<1x32xf32> to vector<8x32xf32>
    %231 = arith.addf %229, %230 : vector<8x32xf32>
    %232 = arith.truncf %206 : vector<8x32xf32> to vector<8x32xbf16>
    %cst_86 = arith.constant dense<0.000000e+00> : vector<8x32xf32>
    %233 = tpu.matmul %232, %5, %cst_86 {dimension_numbers = #tpu.dot_dimension_numbers<[1], [0], [0], [1], [0, 0, 1, 1], [], []>} : vector<8x32xbf16>, vector<32x32xbf16>, vector<8x32xf32> -> vector<8x32xf32>
    %234 = arith.addf %231, %233 : vector<8x32xf32>
    %235 = math.tanh %234 : vector<8x32xf32>
    %236 = arith.truncf %206 : vector<8x32xf32> to vector<8x32xbf16>
    %cst_87 = arith.constant dense<0.000000e+00> : vector<8x32xf32>
    %237 = tpu.matmul %236, %2, %cst_87 {dimension_numbers = #tpu.dot_dimension_numbers<[1], [0], [0], [1], [0, 0, 1, 1], [], []>} : vector<8x32xbf16>, vector<32x32xbf16>, vector<8x32xf32> -> vector<8x32xf32>
    %238 = vector.broadcast %10 : vector<1x32xf32> to vector<8x32xf32>
    %239 = arith.addf %237, %238 : vector<8x32xf32>
    %240 = arith.truncf %214 : vector<8x32xf32> to vector<8x32xbf16>
    %cst_88 = arith.constant dense<0.000000e+00> : vector<8x32xf32>
    %241 = tpu.matmul %240, %6, %cst_88 {dimension_numbers = #tpu.dot_dimension_numbers<[1], [0], [0], [1], [0, 0, 1, 1], [], []>} : vector<8x32xbf16>, vector<32x32xbf16>, vector<8x32xf32> -> vector<8x32xf32>
    %242 = arith.addf %239, %241 : vector<8x32xf32>
    %243 = math.tanh %242 : vector<8x32xf32>
    %244 = arith.truncf %214 : vector<8x32xf32> to vector<8x32xbf16>
    %cst_89 = arith.constant dense<0.000000e+00> : vector<8x32xf32>
    %245 = tpu.matmul %244, %3, %cst_89 {dimension_numbers = #tpu.dot_dimension_numbers<[1], [0], [0], [1], [0, 0, 1, 1], [], []>} : vector<8x32xbf16>, vector<32x32xbf16>, vector<8x32xf32> -> vector<8x32xf32>
    %246 = vector.broadcast %11 : vector<1x32xf32> to vector<8x32xf32>
    %247 = arith.addf %245, %246 : vector<8x32xf32>
    %248 = arith.truncf %222 : vector<8x32xf32> to vector<8x32xbf16>
    %cst_90 = arith.constant dense<0.000000e+00> : vector<8x32xf32>
    %249 = tpu.matmul %248, %7, %cst_90 {dimension_numbers = #tpu.dot_dimension_numbers<[1], [0], [0], [1], [0, 0, 1, 1], [], []>} : vector<8x32xbf16>, vector<32x32xbf16>, vector<8x32xf32> -> vector<8x32xf32>
    %250 = arith.addf %247, %249 : vector<8x32xf32>
    %251 = math.tanh %250 : vector<8x32xf32>
    %252 = arith.truncf %251 : vector<8x32xf32> to vector<8x32xbf16>
    %cst_91 = arith.constant dense<0.000000e+00> : vector<8x8xf32>
    %253 = tpu.matmul %252, %12, %cst_91 {dimension_numbers = #tpu.dot_dimension_numbers<[1], [0], [0], [1], [0, 0, 1, 1], [], []>} : vector<8x32xbf16>, vector<32x8xbf16>, vector<8x8xf32> -> vector<8x8xf32>
    %254 = vector.broadcast %13 : vector<1x8xf32> to vector<8x8xf32>
    %255 = arith.addf %253, %254 : vector<8x8xf32>
    %c40 = arith.constant 40 : index
    %c0_92 = arith.constant 0 : index
    %256 = vector.load %arg15[%c40, %c0_92] : memref<64x8xf32, #tpu.memory_space<vmem>>, vector<8x8xf32>
    tpu.vector_store %arg15[%c40, %c0_92], %255 {strides = array<i32>} : memref<64x8xf32, #tpu.memory_space<vmem>>, vector<8x8xf32>,
    %257 = arith.truncf %235 : vector<8x32xf32> to vector<8x32xbf16>
    %cst_93 = arith.constant dense<0.000000e+00> : vector<8x32xf32>
    %258 = tpu.matmul %257, %2, %cst_93 {dimension_numbers = #tpu.dot_dimension_numbers<[1], [0], [0], [1], [0, 0, 1, 1], [], []>} : vector<8x32xbf16>, vector<32x32xbf16>, vector<8x32xf32> -> vector<8x32xf32>
    %259 = vector.broadcast %10 : vector<1x32xf32> to vector<8x32xf32>
    %260 = arith.addf %258, %259 : vector<8x32xf32>
    %261 = arith.truncf %243 : vector<8x32xf32> to vector<8x32xbf16>
    %cst_94 = arith.constant dense<0.000000e+00> : vector<8x32xf32>
    %262 = tpu.matmul %261, %6, %cst_94 {dimension_numbers = #tpu.dot_dimension_numbers<[1], [0], [0], [1], [0, 0, 1, 1], [], []>} : vector<8x32xbf16>, vector<32x32xbf16>, vector<8x32xf32> -> vector<8x32xf32>
    %263 = arith.addf %260, %262 : vector<8x32xf32>
    %264 = math.tanh %263 : vector<8x32xf32>
    %265 = arith.truncf %243 : vector<8x32xf32> to vector<8x32xbf16>
    %cst_95 = arith.constant dense<0.000000e+00> : vector<8x32xf32>
    %266 = tpu.matmul %265, %3, %cst_95 {dimension_numbers = #tpu.dot_dimension_numbers<[1], [0], [0], [1], [0, 0, 1, 1], [], []>} : vector<8x32xbf16>, vector<32x32xbf16>, vector<8x32xf32> -> vector<8x32xf32>
    %267 = vector.broadcast %11 : vector<1x32xf32> to vector<8x32xf32>
    %268 = arith.addf %266, %267 : vector<8x32xf32>
    %269 = arith.truncf %251 : vector<8x32xf32> to vector<8x32xbf16>
    %cst_96 = arith.constant dense<0.000000e+00> : vector<8x32xf32>
    %270 = tpu.matmul %269, %7, %cst_96 {dimension_numbers = #tpu.dot_dimension_numbers<[1], [0], [0], [1], [0, 0, 1, 1], [], []>} : vector<8x32xbf16>, vector<32x32xbf16>, vector<8x32xf32> -> vector<8x32xf32>
    %271 = arith.addf %268, %270 : vector<8x32xf32>
    %272 = math.tanh %271 : vector<8x32xf32>
    %273 = arith.truncf %272 : vector<8x32xf32> to vector<8x32xbf16>
    %cst_97 = arith.constant dense<0.000000e+00> : vector<8x8xf32>
    %274 = tpu.matmul %273, %12, %cst_97 {dimension_numbers = #tpu.dot_dimension_numbers<[1], [0], [0], [1], [0, 0, 1, 1], [], []>} : vector<8x32xbf16>, vector<32x8xbf16>, vector<8x8xf32> -> vector<8x8xf32>
    %275 = vector.broadcast %13 : vector<1x8xf32> to vector<8x8xf32>
    %276 = arith.addf %274, %275 : vector<8x8xf32>
    %c48 = arith.constant 48 : index
    %c0_98 = arith.constant 0 : index
    %277 = vector.load %arg15[%c48, %c0_98] : memref<64x8xf32, #tpu.memory_space<vmem>>, vector<8x8xf32>
    tpu.vector_store %arg15[%c48, %c0_98], %276 {strides = array<i32>} : memref<64x8xf32, #tpu.memory_space<vmem>>, vector<8x8xf32>,
    %278 = arith.truncf %264 : vector<8x32xf32> to vector<8x32xbf16>
    %cst_99 = arith.constant dense<0.000000e+00> : vector<8x32xf32>
    %279 = tpu.matmul %278, %3, %cst_99 {dimension_numbers = #tpu.dot_dimension_numbers<[1], [0], [0], [1], [0, 0, 1, 1], [], []>} : vector<8x32xbf16>, vector<32x32xbf16>, vector<8x32xf32> -> vector<8x32xf32>
    %280 = vector.broadcast %11 : vector<1x32xf32> to vector<8x32xf32>
    %281 = arith.addf %279, %280 : vector<8x32xf32>
    %282 = arith.truncf %272 : vector<8x32xf32> to vector<8x32xbf16>
    %cst_100 = arith.constant dense<0.000000e+00> : vector<8x32xf32>
    %283 = tpu.matmul %282, %7, %cst_100 {dimension_numbers = #tpu.dot_dimension_numbers<[1], [0], [0], [1], [0, 0, 1, 1], [], []>} : vector<8x32xbf16>, vector<32x32xbf16>, vector<8x32xf32> -> vector<8x32xf32>
    %284 = arith.addf %281, %283 : vector<8x32xf32>
    %285 = math.tanh %284 : vector<8x32xf32>
    %286 = arith.truncf %285 : vector<8x32xf32> to vector<8x32xbf16>
    %cst_101 = arith.constant dense<0.000000e+00> : vector<8x8xf32>
    %287 = tpu.matmul %286, %12, %cst_101 {dimension_numbers = #tpu.dot_dimension_numbers<[1], [0], [0], [1], [0, 0, 1, 1], [], []>} : vector<8x32xbf16>, vector<32x8xbf16>, vector<8x8xf32> -> vector<8x8xf32>
    %288 = vector.broadcast %13 : vector<1x8xf32> to vector<8x8xf32>
    %289 = arith.addf %287, %288 : vector<8x8xf32>
    %c56 = arith.constant 56 : index
    %c0_102 = arith.constant 0 : index
    %290 = vector.load %arg15[%c56, %c0_102] : memref<64x8xf32, #tpu.memory_space<vmem>>, vector<8x8xf32>
    tpu.vector_store %arg15[%c56, %c0_102], %289 {strides = array<i32>} : memref<64x8xf32, #tpu.memory_space<vmem>>, vector<8x8xf32>,
    return
  }
}

</mosaic_0001>

<llo_original>
// kernel: rnn_forward.1
$region0: #{rnn_forward.1}
  #allocation0 [shape = 'u32[]', space=smem, size = 0x4, offset = 0x4, fixed_abs, tag = 'smem constant byte address 0x4 - core index']
  #allocation1 [shape = 'u32[72,128]{1,0:T(1,128)}', space=vmem, size = 0x9000, scoped, tag = 'internal scratch']
  %s0 = inlined_call_operand.vmem [shape: bf16[64,16], index: 0, kind: input, shape index: {}]
  %s1 = inlined_call_operand.hbm [shape: bf16[16,32], index: 1, kind: input, shape index: {}]
  %s2 = inlined_call_operand.vmem [shape: bf16[32,32], index: 2, kind: input, shape index: {}]
  %s3 = inlined_call_operand.vmem [shape: f32[1,32], index: 3, kind: input, shape index: {}]
  %s4 = inlined_call_operand.vmem [shape: bf16[32,32], index: 4, kind: input, shape index: {}]
  %s5 = inlined_call_operand.vmem [shape: bf16[32,32], index: 5, kind: input, shape index: {}]
  %s6 = inlined_call_operand.vmem [shape: f32[1,32], index: 6, kind: input, shape index: {}]
  %s7 = inlined_call_operand.vmem [shape: bf16[32,32], index: 7, kind: input, shape index: {}]
  %s8 = inlined_call_operand.vmem [shape: bf16[32,32], index: 8, kind: input, shape index: {}]
  %s9 = inlined_call_operand.vmem [shape: f32[1,32], index: 9, kind: input, shape index: {}]
  %s10 = inlined_call_operand.vmem [shape: bf16[32,32], index: 10, kind: input, shape index: {}]
  %s11 = inlined_call_operand.hbm [shape: bf16[32,32], index: 11, kind: input, shape index: {}]
  %s12 = inlined_call_operand.vmem [shape: f32[1,32], index: 12, kind: input, shape index: {}]
  %s13 = inlined_call_operand.vmem [shape: bf16[32,8], index: 13, kind: input, shape index: {}]
  %s14 = inlined_call_operand.hbm [shape: f32[1,8], index: 14, kind: input, shape index: {}]
  %s15 = inlined_call_operand.vmem [shape: f32[64,8], index: 15, kind: output, shape index: {}]
  %s16 = sld [smem:[#allocation0]]
  $region82: #{rnn_forward.1} parent=0
    _
  %s18 = ssub.s32 1, %s16
  %s19 = scalar_select 0, %s18, %s16
  $region1: #{rnn_forward.1} parent=0
    #allocation2 [shape = 'u8[4096]{0}', space=vmem, size = 0x1000, scoped, tag = 'input window, operand 1, single buffered']
    #allocation3 [shape = 's32[1]{0}', space=sflag, size = 0x4, scoped, tag = 'scoped memory for rnn_forward.1']
    #allocation4 [shape = 'u8[8192]{0}', space=vmem, size = 0x2000, scoped, tag = 'input window, operand 11, single buffered']
    #allocation5 [shape = 's32[1]{0}', space=sflag, size = 0x4, scoped, tag = 'scoped memory for rnn_forward.1']
    #allocation6 [shape = 'u8[512]{0}', space=vmem, size = 0x400, scoped, tag = 'input window, operand 14, single buffered']
    %20 = vsyncpa [#allocation3], 0
    %21 = vsyncpa [#allocation5], 0
    // Predicated region
    $region2: #{rnn_forward.1} parent=1 // pred_check
      _
    $region3: #{rnn_forward.1} parent=1 // pred_check_branch
      %23 = sbr.rel (0) target = $region5
    $region4: #{rnn_forward.1} parent=1 // pred_region
      _
    $region5: #{rnn_forward.1} parent=1 // pred_fallthru
      _
    // Predicated region
    $region6: #{rnn_forward.1} parent=1 // pred_check
      _
    $region7: #{rnn_forward.1} parent=1 // pred_check_branch
      %25 = sbr.rel (0) target = $region9
    $region8: #{rnn_forward.1} parent=1 // pred_region
      %27 = vsyncadd [#allocation3], 0
      %s28 = sshll.u32 %s1, 4
      %s29 = int_to_ptr.hbm [resolvable:$true] %s28
      %s30 = sshll.u32 [#allocation2], 4
      %s31 = int_to_ptr.vmem [resolvable:$true] %s30
      %36 = dma.hbm_to_vmem [thread:$0]  %s29, 128, %s31, [#allocation3], 64, 64, 4
    $region9: #{rnn_forward.1} parent=1 // pred_fallthru
      _
    // Predicated region
    $region10: #{rnn_forward.1} parent=1 // pred_check
      _
    $region11: #{rnn_forward.1} parent=1 // pred_check_branch
      %38 = sbr.rel (0) target = $region13
    $region12: #{rnn_forward.1} parent=1 // pred_region
      _
    $region13: #{rnn_forward.1} parent=1 // pred_fallthru
      _
    // Predicated region
    $region14: #{rnn_forward.1} parent=1 // pred_check
      _
    $region15: #{rnn_forward.1} parent=1 // pred_check_branch
      %40 = sbr.rel (0) target = $region17
    $region16: #{rnn_forward.1} parent=1 // pred_region
      _
    $region17: #{rnn_forward.1} parent=1 // pred_fallthru
      _
    // Predicated region
    $region18: #{rnn_forward.1} parent=1 // pred_check
      _
    $region19: #{rnn_forward.1} parent=1 // pred_check_branch
      %42 = sbr.rel (0) target = $region21
    $region20: #{rnn_forward.1} parent=1 // pred_region
      _
    $region21: #{rnn_forward.1} parent=1 // pred_fallthru
      _
    // Predicated region
    $region22: #{rnn_forward.1} parent=1 // pred_check
      _
    $region23: #{rnn_forward.1} parent=1 // pred_check_branch
      %44 = sbr.rel (0) target = $region25
    $region24: #{rnn_forward.1} parent=1 // pred_region
      _
    $region25: #{rnn_forward.1} parent=1 // pred_fallthru
      _
    // Predicated region
    $region26: #{rnn_forward.1} parent=1 // pred_check
      _
    $region27: #{rnn_forward.1} parent=1 // pred_check_branch
      %46 = sbr.rel (0) target = $region29
    $region28: #{rnn_forward.1} parent=1 // pred_region
      _
    $region29: #{rnn_forward.1} parent=1 // pred_fallthru
      _
    // Predicated region
    $region30: #{rnn_forward.1} parent=1 // pred_check
      _
    $region31: #{rnn_forward.1} parent=1 // pred_check_branch
      %48 = sbr.rel (0) target = $region33
    $region32: #{rnn_forward.1} parent=1 // pred_region
      _
    $region33: #{rnn_forward.1} parent=1 // pred_fallthru
      _
    // Predicated region
    $region34: #{rnn_forward.1} parent=1 // pred_check
      _
    $region35: #{rnn_forward.1} parent=1 // pred_check_branch
      %50 = sbr.rel (0) target = $region37
    $region36: #{rnn_forward.1} parent=1 // pred_region
      _
    $region37: #{rnn_forward.1} parent=1 // pred_fallthru
      _
    // Predicated region
    $region38: #{rnn_forward.1} parent=1 // pred_check
      _
    $region39: #{rnn_forward.1} parent=1 // pred_check_branch
      %52 = sbr.rel (0) target = $region41
    $region40: #{rnn_forward.1} parent=1 // pred_region
      _
    $region41: #{rnn_forward.1} parent=1 // pred_fallthru
      _
    // Predicated region
    $region42: #{rnn_forward.1} parent=1 // pred_check
      _
    $region43: #{rnn_forward.1} parent=1 // pred_check_branch
      %54 = sbr.rel (0) target = $region45
    $region44: #{rnn_forward.1} parent=1 // pred_region
      _
    $region45: #{rnn_forward.1} parent=1 // pred_fallthru
      _
    // Predicated region
    $region46: #{rnn_forward.1} parent=1 // pred_check
      _
    $region47: #{rnn_forward.1} parent=1 // pred_check_branch
      %56 = sbr.rel (0) target = $region49
    $region48: #{rnn_forward.1} parent=1 // pred_region
      %58 = vsyncadd [#allocation5], 0
      %s59 = sshll.u32 %s11, 4
      %s60 = int_to_ptr.hbm [resolvable:$true] %s59
      %s61 = sshll.u32 [#allocation4], 4
      %s62 = int_to_ptr.vmem [resolvable:$true] %s61
      %67 = dma.hbm_to_vmem [thread:$0]  %s60, 256, %s62, [#allocation5], 64, 64, 4
    $region49: #{rnn_forward.1} parent=1 // pred_fallthru
      _
    // Predicated region
    $region50: #{rnn_forward.1} parent=1 // pred_check
      _
    $region51: #{rnn_forward.1} parent=1 // pred_check_branch
      %69 = sbr.rel (0) target = $region53
    $region52: #{rnn_forward.1} parent=1 // pred_region
      _
    $region53: #{rnn_forward.1} parent=1 // pred_fallthru
      _
    // Predicated region
    $region54: #{rnn_forward.1} parent=1 // pred_check
      _
    $region55: #{rnn_forward.1} parent=1 // pred_check_branch
      %71 = sbr.rel (0) target = $region57
    $region56: #{rnn_forward.1} parent=1 // pred_region
      _
    $region57: #{rnn_forward.1} parent=1 // pred_fallthru
      _
    // Predicated region
    $region58: #{rnn_forward.1} parent=1 // pred_check
      _
    $region59: #{rnn_forward.1} parent=1 // pred_check_branch
      %73 = sbr.rel (0) target = $region61
    $region60: #{rnn_forward.1} parent=1 // pred_region
      %75 = vsyncadd [#allocation5], 0
      %s77 = sshll.u32 %s14, 4
      %s78 = int_to_ptr.hbm [resolvable:$true] %s77
      %s79 = sshll.u32 [#allocation6], 4
      %s80 = int_to_ptr.vmem [resolvable:$true] %s79
      %82 = dma.hbm_to_vmem [thread:$0]  %s78, 16, %s80, [#allocation5]
    $region61: #{rnn_forward.1} parent=1 // pred_fallthru
      _
    // Predicated region
    $region62: #{rnn_forward.1} parent=1 // pred_check
      _
    $region63: #{rnn_forward.1} parent=1 // pred_check_branch
      %84 = sbr.rel (0) target = $region65
    $region64: #{rnn_forward.1} parent=1 // pred_region
      %86 = dma.done [#allocation3], 128
    $region65: #{rnn_forward.1} parent=1 // pred_fallthru
      _
    // Predicated region
    $region66: #{rnn_forward.1} parent=1 // pred_check
      _
    $region67: #{rnn_forward.1} parent=1 // pred_check_branch
      %88 = sbr.rel (0) target = $region69
    $region68: #{rnn_forward.1} parent=1 // pred_region
      %90 = dma.done [#allocation5], 256
    $region69: #{rnn_forward.1} parent=1 // pred_fallthru
      _
    // Predicated region
    $region70: #{rnn_forward.1} parent=1 // pred_check
      _
    $region71: #{rnn_forward.1} parent=1 // pred_check_branch
      %92 = sbr.rel (0) target = $region73
    $region72: #{rnn_forward.1} parent=1 // pred_region
      %94 = dma.done [#allocation5], 16
    $region73: #{rnn_forward.1} parent=1 // pred_fallthru
      _
    %v96 = vld [vmem:[#allocation2] sm:$0xf]
    %v97 = vld [vmem:[#allocation2 + $0x4] sm:$0xf]
    %v98 = vld [vmem:[%s4] sm:$0xf]
    %v99 = vld [vmem:[%s4 + $0x4] sm:$0xf]
    %v100 = vld [vmem:[%s4 + $0x8] sm:$0xf]
    %v101 = vld [vmem:[%s4 + $0xc] sm:$0xf]
    %v102 = vld [vmem:[%s7] sm:$0xf]
    %v103 = vld [vmem:[%s7 + $0x4] sm:$0xf]
    %v104 = vld [vmem:[%s7 + $0x8] sm:$0xf]
    %v105 = vld [vmem:[%s7 + $0xc] sm:$0xf]
    %v106 = vld [vmem:[%s10] sm:$0xf]
    %v107 = vld [vmem:[%s10 + $0x4] sm:$0xf]
    %v108 = vld [vmem:[%s10 + $0x8] sm:$0xf]
    %v109 = vld [vmem:[%s10 + $0xc] sm:$0xf]
    %v110 = vld [vmem:[%s2] sm:$0xf]
    %v111 = vld [vmem:[%s2 + $0x4] sm:$0xf]
    %v112 = vld [vmem:[%s2 + $0x8] sm:$0xf]
    %v113 = vld [vmem:[%s2 + $0xc] sm:$0xf]
    %v114 = vld [vmem:[%s5] sm:$0xf]
    %v115 = vld [vmem:[%s5 + $0x4] sm:$0xf]
    %v116 = vld [vmem:[%s5 + $0x8] sm:$0xf]
    %v117 = vld [vmem:[%s5 + $0xc] sm:$0xf]
    %v118 = vld [vmem:[%s8] sm:$0xf]
    %v119 = vld [vmem:[%s8 + $0x4] sm:$0xf]
    %v120 = vld [vmem:[%s8 + $0x8] sm:$0xf]
    %v121 = vld [vmem:[%s8 + $0xc] sm:$0xf]
    %v122 = vld [vmem:[#allocation4] sm:$0xf]
    %v123 = vld [vmem:[#allocation4 + $0x4] sm:$0xf]
    %v124 = vld [vmem:[#allocation4 + $0x8] sm:$0xf]
    %v125 = vld [vmem:[#allocation4 + $0xc] sm:$0xf]
    %v126 = vld [vmem:[%s3] sm:$0x1]
    %v127 = vld [vmem:[%s6] sm:$0x1]
    %v128 = vld [vmem:[%s9] sm:$0x1]
    %v129 = vld [vmem:[%s12] sm:$0x1]
    %v130 = vld [vmem:[%s13] sm:$0xf]
    %v131 = vld [vmem:[%s13 + $0x4] sm:$0xf]
    %v132 = vld [vmem:[%s13 + $0x8] sm:$0xf]
    %v133 = vld [vmem:[%s13 + $0xc] sm:$0xf]
    %v134 = vld [vmem:[#allocation6] sm:$0x1]
    %v135 = vld [vmem:[%s0] sm:$0xf]
    %v136 = vld [vmem:[%s0 + $0x4] sm:$0xf]
    %v137 = vld [vmem:[%s0 + $0x8] sm:$0xf]
    %v138 = vld [vmem:[%s0 + $0xc] sm:$0xf]
    %v139 = vld [vmem:[%s0 + $0x10] sm:$0xf]
    %v140 = vld [vmem:[%s0 + $0x14] sm:$0xf]
    %v141 = vld [vmem:[%s0 + $0x18] sm:$0xf]
    %v142 = vld [vmem:[%s0 + $0x1c] sm:$0xf]
    %v144 = vperm.slane %v126, 0
    %v154 = vunpack.c.l.b16 %v135
    %v155 = vunpack.c.l.b16 %v136
    %v156 = vunpack.c.l.b16 %v137
    %v157 = vunpack.c.l.b16 %v138
    %v158 = vunpack.c.l.b16 %v139
    %v159 = vunpack.c.l.b16 %v140
    %v160 = vunpack.c.l.b16 %v141
    %v161 = vunpack.c.l.b16 %v142
    %v162 = vpack.c.b16 %v155, %v154
    %v163 = vpack.c.b16 %v157, %v156
    %v164 = vpack.c.b16 %v159, %v158
    %v165 = vpack.c.b16 %v161, %v160
    %v168 = vunpack.c.l.b16 %v96
    %v169 = vunpack.c.l.b16 %v97
    %v170 = vpack.c.b16 %v169, %v168
    %vm172 = vcmask 130048
    %v174 = vsel %vm172, %v162, 0
    %v177 = vsel %vm172, %v163, 0
    %v180 = vsel %vm172, %v164, 0
    %v183 = vsel %vm172, %v165, 0
    %185 = vmatpush.bf16.msra.mxu0 0
    %186 = vmatpush.bf16.msra.mxu0 0
    %187 = vmatpush.bf16.msra.mxu0 0
    %188 = vmatpush.bf16.msra.mxu0 0
    %189 = vmatpush.bf16.msra.mxu0 0
    %190 = vmatpush.bf16.msra.mxu0 0
    %191 = vmatpush.bf16.msra.mxu0 0
    %192 = vmatpush.bf16.msra.mxu0 %v170
    %193 = vmatmul.bf16.gmra.mxu0 %v174
    %v194 = vpop.f32.mrf.mxu0
    %v195 = vadd.f32 %v144, %v194
    %v196 = vpop.f32.mrf.mxu0
    %v197 = vadd.f32 %v144, %v196
    %198 = vmatmul.bf16.gmra.mxu0 %v177
    %v199 = vpop.f32.mrf.mxu0
    %v200 = vadd.f32 %v144, %v199
    %v201 = vpop.f32.mrf.mxu0
    %v202 = vadd.f32 %v144, %v201
    %203 = vmatmul.bf16.gmra.mxu0 %v180
    %v204 = vpop.f32.mrf.mxu0
    %v205 = vadd.f32 %v144, %v204
    %v206 = vpop.f32.mrf.mxu0
    %v207 = vadd.f32 %v144, %v206
    %208 = vmatmul.bf16.gmra.mxu0 %v183
    %v209 = vpop.f32.mrf.mxu0
    %v210 = vadd.f32 %v144, %v209
    %v211 = vpop.f32.mrf.mxu0
    %v212 = vadd.f32 %v144, %v211
    %213 = vdwg.mxu0
    %v218 = vunpack.c.l.b16 %v110
    %v219 = vunpack.c.l.b16 %v111
    %v220 = vunpack.c.l.b16 %v112
    %v221 = vunpack.c.l.b16 %v113
    %v222 = vpack.c.b16 %v219, %v218
    %v223 = vpack.c.b16 %v221, %v220
    %vm226 = vcmask 261120
    %v228 = vsel %vm226, 0, 0
    %230 = vmatpush.bf16.msra.mxu0 0
    %231 = vmatpush.bf16.msra.mxu0 0
    %232 = vmatpush.bf16.msra.mxu0 0
    %233 = vmatpush.bf16.msra.mxu0 0
    %234 = vmatpush.bf16.msra.mxu0 0
    %235 = vmatpush.bf16.msra.mxu0 0
    %236 = vmatpush.bf16.msra.mxu0 %v223
    %237 = vmatpush.bf16.msra.mxu0 %v222
    %238 = vmatmul.bf16.gmra.mxu0 %v228
    %v239 = vpop.f32.mrf.mxu0
    %v240 = vadd.f32 0.0, %v239
    %v241 = vpop.f32.mrf.mxu0
    %242 = vdwg.mxu0
    %v243 = vadd.f32 %v195, %v240
    %v244 = vtanh.pop %v243
    %v245 = vpack.c.bf16 %v244, %v244
    %v247 = vsel %vm226, %v245, 0
    %249 = vmatpush.bf16.msra.mxu0 0
    %250 = vmatpush.bf16.msra.mxu0 0
    %251 = vmatpush.bf16.msra.mxu0 0
    %252 = vmatpush.bf16.msra.mxu0 0
    %253 = vmatpush.bf16.msra.mxu0 0
    %254 = vmatpush.bf16.msra.mxu0 0
    %255 = vmatpush.bf16.msra.mxu0 %v223
    %256 = vmatpush.bf16.msra.mxu0 %v222
    %257 = vmatmul.bf16.gmra.mxu0 %v247
    %v258 = vpop.f32.mrf.mxu0
    %v259 = vadd.f32 0.0, %v258
    %v260 = vpop.f32.mrf.mxu0
    %261 = vdwg.mxu0
    %v262 = vadd.f32 %v197, %v259
    %v263 = vtanh.pop %v262
    %v265 = vperm.slane %v127, 0
    %v271 = vunpack.c.l.b16 %v98
    %v272 = vunpack.c.l.b16 %v99
    %v273 = vunpack.c.l.b16 %v100
    %v274 = vunpack.c.l.b16 %v101
    %v275 = vpack.c.b16 %v272, %v271
    %v276 = vpack.c.b16 %v274, %v273
    %279 = vmatpush.bf16.msra.mxu0 0
    %280 = vmatpush.bf16.msra.mxu0 0
    %281 = vmatpush.bf16.msra.mxu0 0
    %282 = vmatpush.bf16.msra.mxu0 0
    %283 = vmatpush.bf16.msra.mxu0 0
    %284 = vmatpush.bf16.msra.mxu0 0
    %285 = vmatpush.bf16.msra.mxu0 %v276
    %286 = vmatpush.bf16.msra.mxu0 %v275
    %287 = vmatmul.bf16.gmra.mxu0 %v247
    %v288 = vpop.f32.mrf.mxu0
    %v289 = vadd.f32 %v265, %v288
    %v290 = vpop.f32.mrf.mxu0
    %291 = vdwg.mxu0
    %v296 = vunpack.c.l.b16 %v114
    %v297 = vunpack.c.l.b16 %v115
    %v298 = vunpack.c.l.b16 %v116
    %v299 = vunpack.c.l.b16 %v117
    %v300 = vpack.c.b16 %v297, %v296
    %v301 = vpack.c.b16 %v299, %v298
    %304 = vmatpush.bf16.msra.mxu0 0
    %305 = vmatpush.bf16.msra.mxu0 0
    %306 = vmatpush.bf16.msra.mxu0 0
    %307 = vmatpush.bf16.msra.mxu0 0
    %308 = vmatpush.bf16.msra.mxu0 0
    %309 = vmatpush.bf16.msra.mxu0 0
    %310 = vmatpush.bf16.msra.mxu0 %v301
    %311 = vmatpush.bf16.msra.mxu0 %v300
    %312 = vmatmul.bf16.gmra.mxu0 %v228
    %v313 = vpop.f32.mrf.mxu0
    %v314 = vadd.f32 0.0, %v313
    %v315 = vpop.f32.mrf.mxu0
    %316 = vdwg.mxu0
    %v317 = vadd.f32 %v289, %v314
    %v318 = vtanh.pop %v317
    %v319 = vpack.c.bf16 %v263, %v263
    %v321 = vsel %vm226, %v319, 0
    %323 = vmatpush.bf16.msra.mxu0 0
    %324 = vmatpush.bf16.msra.mxu0 0
    %325 = vmatpush.bf16.msra.mxu0 0
    %326 = vmatpush.bf16.msra.mxu0 0
    %327 = vmatpush.bf16.msra.mxu0 0
    %328 = vmatpush.bf16.msra.mxu0 0
    %329 = vmatpush.bf16.msra.mxu0 %v223
    %330 = vmatpush.bf16.msra.mxu0 %v222
    %331 = vmatmul.bf16.gmra.mxu0 %v321
    %v332 = vpop.f32.mrf.mxu0
    %v333 = vadd.f32 0.0, %v332
    %v334 = vpop.f32.mrf.mxu0
    %335 = vdwg.mxu0
    %v336 = vadd.f32 %v200, %v333
    %v337 = vtanh.pop %v336
    %338 = vmatpush.bf16.msra.mxu0 0
    %339 = vmatpush.bf16.msra.mxu0 0
    %340 = vmatpush.bf16.msra.mxu0 0
    %341 = vmatpush.bf16.msra.mxu0 0
    %342 = vmatpush.bf16.msra.mxu0 0
    %343 = vmatpush.bf16.msra.mxu0 0
    %344 = vmatpush.bf16.msra.mxu0 %v276
    %345 = vmatpush.bf16.msra.mxu0 %v275
    %346 = vmatmul.bf16.gmra.mxu0 %v321
    %v347 = vpop.f32.mrf.mxu0
    %v348 = vadd.f32 %v265, %v347
    %v349 = vpop.f32.mrf.mxu0
    %350 = vdwg.mxu0
    %v351 = vpack.c.bf16 %v318, %v318
    %v353 = vsel %vm226, %v351, 0
    %355 = vmatpush.bf16.msra.mxu0 0
    %356 = vmatpush.bf16.msra.mxu0 0
    %357 = vmatpush.bf16.msra.mxu0 0
    %358 = vmatpush.bf16.msra.mxu0 0
    %359 = vmatpush.bf16.msra.mxu0 0
    %360 = vmatpush.bf16.msra.mxu0 0
    %361 = vmatpush.bf16.msra.mxu0 %v301
    %362 = vmatpush.bf16.msra.mxu0 %v300
    %363 = vmatmul.bf16.gmra.mxu0 %v353
    %v364 = vpop.f32.mrf.mxu0
    %v365 = vadd.f32 0.0, %v364
    %v366 = vpop.f32.mrf.mxu0
    %367 = vdwg.mxu0
    %v368 = vadd.f32 %v348, %v365
    %v369 = vtanh.pop %v368
    %v371 = vperm.slane %v128, 0
    %v377 = vunpack.c.l.b16 %v102
    %v378 = vunpack.c.l.b16 %v103
    %v379 = vunpack.c.l.b16 %v104
    %v380 = vunpack.c.l.b16 %v105
    %v381 = vpack.c.b16 %v378, %v377
    %v382 = vpack.c.b16 %v380, %v379
    %385 = vmatpush.bf16.msra.mxu0 0
    %386 = vmatpush.bf16.msra.mxu0 0
    %387 = vmatpush.bf16.msra.mxu0 0
    %388 = vmatpush.bf16.msra.mxu0 0
    %389 = vmatpush.bf16.msra.mxu0 0
    %390 = vmatpush.bf16.msra.mxu0 0
    %391 = vmatpush.bf16.msra.mxu0 %v382
    %392 = vmatpush.bf16.msra.mxu0 %v381
    %393 = vmatmul.bf16.gmra.mxu0 %v353
    %v394 = vpop.f32.mrf.mxu0
    %v395 = vadd.f32 %v371, %v394
    %v396 = vpop.f32.mrf.mxu0
    %397 = vdwg.mxu0
    %v402 = vunpack.c.l.b16 %v118
    %v403 = vunpack.c.l.b16 %v119
    %v404 = vunpack.c.l.b16 %v120
    %v405 = vunpack.c.l.b16 %v121
    %v406 = vpack.c.b16 %v403, %v402
    %v407 = vpack.c.b16 %v405, %v404
    %410 = vmatpush.bf16.msra.mxu0 0
    %411 = vmatpush.bf16.msra.mxu0 0
    %412 = vmatpush.bf16.msra.mxu0 0
    %413 = vmatpush.bf16.msra.mxu0 0
    %414 = vmatpush.bf16.msra.mxu0 0
    %415 = vmatpush.bf16.msra.mxu0 0
    %416 = vmatpush.bf16.msra.mxu0 %v407
    %417 = vmatpush.bf16.msra.mxu0 %v406
    %418 = vmatmul.bf16.gmra.mxu0 %v228
    %v419 = vpop.f32.mrf.mxu0
    %v420 = vadd.f32 0.0, %v419
    %v421 = vpop.f32.mrf.mxu0
    %422 = vdwg.mxu0
    %v423 = vadd.f32 %v395, %v420
    %v424 = vtanh.pop %v423
    %v425 = vpack.c.bf16 %v337, %v337
    %v427 = vsel %vm226, %v425, 0
    %429 = vmatpush.bf16.msra.mxu0 0
    %430 = vmatpush.bf16.msra.mxu0 0
    %431 = vmatpush.bf16.msra.mxu0 0
    %432 = vmatpush.bf16.msra.mxu0 0
    %433 = vmatpush.bf16.msra.mxu0 0
    %434 = vmatpush.bf16.msra.mxu0 0
    %435 = vmatpush.bf16.msra.mxu0 %v223
    %436 = vmatpush.bf16.msra.mxu0 %v222
    %437 = vmatmul.bf16.gmra.mxu0 %v427
    %v438 = vpop.f32.mrf.mxu0
    %v439 = vadd.f32 0.0, %v438
    %v440 = vpop.f32.mrf.mxu0
    %441 = vdwg.mxu0
    %v442 = vadd.f32 %v202, %v439
    %v443 = vtanh.pop %v442
    %444 = vmatpush.bf16.msra.mxu0 0
    %445 = vmatpush.bf16.msra.mxu0 0
    %446 = vmatpush.bf16.msra.mxu0 0
    %447 = vmatpush.bf16.msra.mxu0 0
    %448 = vmatpush.bf16.msra.mxu0 0
    %449 = vmatpush.bf16.msra.mxu0 0
    %450 = vmatpush.bf16.msra.mxu0 %v276
    %451 = vmatpush.bf16.msra.mxu0 %v275
    %452 = vmatmul.bf16.gmra.mxu0 %v427
    %v453 = vpop.f32.mrf.mxu0
    %v454 = vadd.f32 %v265, %v453
    %v455 = vpop.f32.mrf.mxu0
    %456 = vdwg.mxu0
    %v457 = vpack.c.bf16 %v369, %v369
    %v459 = vsel %vm226, %v457, 0
    %461 = vmatpush.bf16.msra.mxu0 0
    %462 = vmatpush.bf16.msra.mxu0 0
    %463 = vmatpush.bf16.msra.mxu0 0
    %464 = vmatpush.bf16.msra.mxu0 0
    %465 = vmatpush.bf16.msra.mxu0 0
    %466 = vmatpush.bf16.msra.mxu0 0
    %467 = vmatpush.bf16.msra.mxu0 %v301
    %468 = vmatpush.bf16.msra.mxu0 %v300
    %469 = vmatmul.bf16.gmra.mxu0 %v459
    %v470 = vpop.f32.mrf.mxu0
    %v471 = vadd.f32 0.0, %v470
    %v472 = vpop.f32.mrf.mxu0
    %473 = vdwg.mxu0
    %v474 = vadd.f32 %v454, %v471
    %v475 = vtanh.pop %v474
    %476 = vmatpush.bf16.msra.mxu0 0
    %477 = vmatpush.bf16.msra.mxu0 0
    %478 = vmatpush.bf16.msra.mxu0 0
    %479 = vmatpush.bf16.msra.mxu0 0
    %480 = vmatpush.bf16.msra.mxu0 0
    %481 = vmatpush.bf16.msra.mxu0 0
    %482 = vmatpush.bf16.msra.mxu0 %v382
    %483 = vmatpush.bf16.msra.mxu0 %v381
    %484 = vmatmul.bf16.gmra.mxu0 %v459
    %v485 = vpop.f32.mrf.mxu0
    %v486 = vadd.f32 %v371, %v485
    %v487 = vpop.f32.mrf.mxu0
    %488 = vdwg.mxu0
    %v489 = vpack.c.bf16 %v424, %v424
    %v491 = vsel %vm226, %v489, 0
    %493 = vmatpush.bf16.msra.mxu0 0
    %494 = vmatpush.bf16.msra.mxu0 0
    %495 = vmatpush.bf16.msra.mxu0 0
    %496 = vmatpush.bf16.msra.mxu0 0
    %497 = vmatpush.bf16.msra.mxu0 0
    %498 = vmatpush.bf16.msra.mxu0 0
    %499 = vmatpush.bf16.msra.mxu0 %v407
    %500 = vmatpush.bf16.msra.mxu0 %v406
    %501 = vmatmul.bf16.gmra.mxu0 %v491
    %v502 = vpop.f32.mrf.mxu0
    %v503 = vadd.f32 0.0, %v502
    %v504 = vpop.f32.mrf.mxu0
    %505 = vdwg.mxu0
    %v506 = vadd.f32 %v486, %v503
    %v507 = vtanh.pop %v506
    %v509 = vperm.slane %v129, 0
    %v515 = vunpack.c.l.b16 %v106
    %v516 = vunpack.c.l.b16 %v107
    %v517 = vunpack.c.l.b16 %v108
    %v518 = vunpack.c.l.b16 %v109
    %v519 = vpack.c.b16 %v516, %v515
    %v520 = vpack.c.b16 %v518, %v517
    %523 = vmatpush.bf16.msra.mxu0 0
    %524 = vmatpush.bf16.msra.mxu0 0
    %525 = vmatpush.bf16.msra.mxu0 0
    %526 = vmatpush.bf16.msra.mxu0 0
    %527 = vmatpush.bf16.msra.mxu0 0
    %528 = vmatpush.bf16.msra.mxu0 0
    %529 = vmatpush.bf16.msra.mxu0 %v520
    %530 = vmatpush.bf16.msra.mxu0 %v519
    %531 = vmatmul.bf16.gmra.mxu0 %v491
    %v532 = vpop.f32.mrf.mxu0
    %v533 = vadd.f32 %v509, %v532
    %v534 = vpop.f32.mrf.mxu0
    %535 = vdwg.mxu0
    %v540 = vunpack.c.l.b16 %v122
    %v541 = vunpack.c.l.b16 %v123
    %v542 = vunpack.c.l.b16 %v124
    %v543 = vunpack.c.l.b16 %v125
    %v544 = vpack.c.b16 %v541, %v540
    %v545 = vpack.c.b16 %v543, %v542
    %548 = vmatpush.bf16.msra.mxu0 0
    %549 = vmatpush.bf16.msra.mxu0 0
    %550 = vmatpush.bf16.msra.mxu0 0
    %551 = vmatpush.bf16.msra.mxu0 0
    %552 = vmatpush.bf16.msra.mxu0 0
    %553 = vmatpush.bf16.msra.mxu0 0
    %554 = vmatpush.bf16.msra.mxu0 %v545
    %555 = vmatpush.bf16.msra.mxu0 %v544
    %556 = vmatmul.bf16.gmra.mxu0 %v228
    %v557 = vpop.f32.mrf.mxu0
    %v558 = vadd.f32 0.0, %v557
    %v559 = vpop.f32.mrf.mxu0
    %560 = vdwg.mxu0
    %v561 = vadd.f32 %v533, %v558
    %v562 = vtanh.pop %v561
    %v563 = vpack.c.bf16 %v562, %v562
    %v565 = vperm.slane %v134, 0
    %v571 = vunpack.c.l.b16 %v130
    %v572 = vunpack.c.l.b16 %v131
    %v573 = vunpack.c.l.b16 %v132
    %v574 = vunpack.c.l.b16 %v133
    %v575 = vpack.c.b16 %v572, %v571
    %v576 = vpack.c.b16 %v574, %v573
    %v580 = vsel %vm226, %v563, 0
    %582 = vmatpush.bf16.msra.mxu0 0
    %583 = vmatpush.bf16.msra.mxu0 0
    %584 = vmatpush.bf16.msra.mxu0 0
    %585 = vmatpush.bf16.msra.mxu0 0
    %586 = vmatpush.bf16.msra.mxu0 0
    %587 = vmatpush.bf16.msra.mxu0 0
    %588 = vmatpush.bf16.msra.mxu0 %v576
    %589 = vmatpush.bf16.msra.mxu0 %v575
    %590 = vmatmul.bf16.gmra.mxu0 %v580
    %v591 = vpop.f32.mrf.mxu0
    %v592 = vadd.f32 %v565, %v591
    %v593 = vpop.f32.mrf.mxu0
    %594 = vdwg.mxu0
    %vm595 = vcmask 64512
    %596 = vst.msk [vmem:[%s15] sm:$0xff] %vm595, %v592
    %v597 = vpack.c.bf16 %v443, %v443
    %v599 = vsel %vm226, %v597, 0
    %601 = vmatpush.bf16.msra.mxu0 0
    %602 = vmatpush.bf16.msra.mxu0 0
    %603 = vmatpush.bf16.msra.mxu0 0
    %604 = vmatpush.bf16.msra.mxu0 0
    %605 = vmatpush.bf16.msra.mxu0 0
    %606 = vmatpush.bf16.msra.mxu0 0
    %607 = vmatpush.bf16.msra.mxu0 %v223
    %608 = vmatpush.bf16.msra.mxu0 %v222
    %609 = vmatmul.bf16.gmra.mxu0 %v599
    %v610 = vpop.f32.mrf.mxu0
    %v611 = vadd.f32 0.0, %v610
    %v612 = vpop.f32.mrf.mxu0
    %613 = vdwg.mxu0
    %v614 = vadd.f32 %v205, %v611
    %v615 = vtanh.pop %v614
    %616 = vmatpush.bf16.msra.mxu0 0
    %617 = vmatpush.bf16.msra.mxu0 0
    %618 = vmatpush.bf16.msra.mxu0 0
    %619 = vmatpush.bf16.msra.mxu0 0
    %620 = vmatpush.bf16.msra.mxu0 0
    %621 = vmatpush.bf16.msra.mxu0 0
    %622 = vmatpush.bf16.msra.mxu0 %v276
    %623 = vmatpush.bf16.msra.mxu0 %v275
    %624 = vmatmul.bf16.gmra.mxu0 %v599
    %v625 = vpop.f32.mrf.mxu0
    %v626 = vadd.f32 %v265, %v625
    %v627 = vpop.f32.mrf.mxu0
    %628 = vdwg.mxu0
    %v629 = vpack.c.bf16 %v475, %v475
    %v631 = vsel %vm226, %v629, 0
    %633 = vmatpush.bf16.msra.mxu0 0
    %634 = vmatpush.bf16.msra.mxu0 0
    %635 = vmatpush.bf16.msra.mxu0 0
    %636 = vmatpush.bf16.msra.mxu0 0
    %637 = vmatpush.bf16.msra.mxu0 0
    %638 = vmatpush.bf16.msra.mxu0 0
    %639 = vmatpush.bf16.msra.mxu0 %v301
    %640 = vmatpush.bf16.msra.mxu0 %v300
    %641 = vmatmul.bf16.gmra.mxu0 %v631
    %v642 = vpop.f32.mrf.mxu0
    %v643 = vadd.f32 0.0, %v642
    %v644 = vpop.f32.mrf.mxu0
    %645 = vdwg.mxu0
    %v646 = vadd.f32 %v626, %v643
    %v647 = vtanh.pop %v646
    %648 = vmatpush.bf16.msra.mxu0 0
    %649 = vmatpush.bf16.msra.mxu0 0
    %650 = vmatpush.bf16.msra.mxu0 0
    %651 = vmatpush.bf16.msra.mxu0 0
    %652 = vmatpush.bf16.msra.mxu0 0
    %653 = vmatpush.bf16.msra.mxu0 0
    %654 = vmatpush.bf16.msra.mxu0 %v382
    %655 = vmatpush.bf16.msra.mxu0 %v381
    %656 = vmatmul.bf16.gmra.mxu0 %v631
    %v657 = vpop.f32.mrf.mxu0
    %v658 = vadd.f32 %v371, %v657
    %v659 = vpop.f32.mrf.mxu0
    %660 = vdwg.mxu0
    %v661 = vpack.c.bf16 %v507, %v507
    %v663 = vsel %vm226, %v661, 0
    %665 = vmatpush.bf16.msra.mxu0 0
    %666 = vmatpush.bf16.msra.mxu0 0
    %667 = vmatpush.bf16.msra.mxu0 0
    %668 = vmatpush.bf16.msra.mxu0 0
    %669 = vmatpush.bf16.msra.mxu0 0
    %670 = vmatpush.bf16.msra.mxu0 0
    %671 = vmatpush.bf16.msra.mxu0 %v407
    %672 = vmatpush.bf16.msra.mxu0 %v406
    %673 = vmatmul.bf16.gmra.mxu0 %v663
    %v674 = vpop.f32.mrf.mxu0
    %v675 = vadd.f32 0.0, %v674
    %v676 = vpop.f32.mrf.mxu0
    %677 = vdwg.mxu0
    %v678 = vadd.f32 %v658, %v675
    %v679 = vtanh.pop %v678
    %680 = vmatpush.bf16.msra.mxu0 0
    %681 = vmatpush.bf16.msra.mxu0 0
    %682 = vmatpush.bf16.msra.mxu0 0
    %683 = vmatpush.bf16.msra.mxu0 0
    %684 = vmatpush.bf16.msra.mxu0 0
    %685 = vmatpush.bf16.msra.mxu0 0
    %686 = vmatpush.bf16.msra.mxu0 %v520
    %687 = vmatpush.bf16.msra.mxu0 %v519
    %688 = vmatmul.bf16.gmra.mxu0 %v663
    %v689 = vpop.f32.mrf.mxu0
    %v690 = vadd.f32 %v509, %v689
    %v691 = vpop.f32.mrf.mxu0
    %692 = vdwg.mxu0
    %693 = vmatpush.bf16.msra.mxu0 0
    %694 = vmatpush.bf16.msra.mxu0 0
    %695 = vmatpush.bf16.msra.mxu0 0
    %696 = vmatpush.bf16.msra.mxu0 0
    %697 = vmatpush.bf16.msra.mxu0 0
    %698 = vmatpush.bf16.msra.mxu0 0
    %699 = vmatpush.bf16.msra.mxu0 %v545
    %700 = vmatpush.bf16.msra.mxu0 %v544
    %701 = vmatmul.bf16.gmra.mxu0 %v580
    %v702 = vpop.f32.mrf.mxu0
    %v703 = vadd.f32 0.0, %v702
    %v704 = vpop.f32.mrf.mxu0
    %705 = vdwg.mxu0
    %v706 = vadd.f32 %v690, %v703
    %v707 = vtanh.pop %v706
    %v708 = vpack.c.bf16 %v707, %v707
    %v710 = vsel %vm226, %v708, 0
    %712 = vmatpush.bf16.msra.mxu0 0
    %713 = vmatpush.bf16.msra.mxu0 0
    %714 = vmatpush.bf16.msra.mxu0 0
    %715 = vmatpush.bf16.msra.mxu0 0
    %716 = vmatpush.bf16.msra.mxu0 0
    %717 = vmatpush.bf16.msra.mxu0 0
    %718 = vmatpush.bf16.msra.mxu0 %v576
    %719 = vmatpush.bf16.msra.mxu0 %v575
    %720 = vmatmul.bf16.gmra.mxu0 %v710
    %v721 = vpop.f32.mrf.mxu0
    %v722 = vadd.f32 %v565, %v721
    %v723 = vpop.f32.mrf.mxu0
    %724 = vdwg.mxu0
    %725 = vst.msk [vmem:[%s15 + $0x8] sm:$0xff] %vm595, %v722
    %v726 = vpack.c.bf16 %v615, %v615
    %v728 = vsel %vm226, %v726, 0
    %730 = vmatpush.bf16.msra.mxu0 0
    %731 = vmatpush.bf16.msra.mxu0 0
    %732 = vmatpush.bf16.msra.mxu0 0
    %733 = vmatpush.bf16.msra.mxu0 0
    %734 = vmatpush.bf16.msra.mxu0 0
    %735 = vmatpush.bf16.msra.mxu0 0
    %736 = vmatpush.bf16.msra.mxu0 %v223
    %737 = vmatpush.bf16.msra.mxu0 %v222
    %738 = vmatmul.bf16.gmra.mxu0 %v728
    %v739 = vpop.f32.mrf.mxu0
    %v740 = vadd.f32 0.0, %v739
    %v741 = vpop.f32.mrf.mxu0
    %742 = vdwg.mxu0
    %v743 = vadd.f32 %v207, %v740
    %v744 = vtanh.pop %v743
    %745 = vmatpush.bf16.msra.mxu0 0
    %746 = vmatpush.bf16.msra.mxu0 0
    %747 = vmatpush.bf16.msra.mxu0 0
    %748 = vmatpush.bf16.msra.mxu0 0
    %749 = vmatpush.bf16.msra.mxu0 0
    %750 = vmatpush.bf16.msra.mxu0 0
    %751 = vmatpush.bf16.msra.mxu0 %v276
    %752 = vmatpush.bf16.msra.mxu0 %v275
    %753 = vmatmul.bf16.gmra.mxu0 %v728
    %v754 = vpop.f32.mrf.mxu0
    %v755 = vadd.f32 %v265, %v754
    %v756 = vpop.f32.mrf.mxu0
    %757 = vdwg.mxu0
    %v758 = vpack.c.bf16 %v647, %v647
    %v760 = vsel %vm226, %v758, 0
    %762 = vmatpush.bf16.msra.mxu0 0
    %763 = vmatpush.bf16.msra.mxu0 0
    %764 = vmatpush.bf16.msra.mxu0 0
    %765 = vmatpush.bf16.msra.mxu0 0
    %766 = vmatpush.bf16.msra.mxu0 0
    %767 = vmatpush.bf16.msra.mxu0 0
    %768 = vmatpush.bf16.msra.mxu0 %v301
    %769 = vmatpush.bf16.msra.mxu0 %v300
    %770 = vmatmul.bf16.gmra.mxu0 %v760
    %v771 = vpop.f32.mrf.mxu0
    %v772 = vadd.f32 0.0, %v771
    %v773 = vpop.f32.mrf.mxu0
    %774 = vdwg.mxu0
    %v775 = vadd.f32 %v755, %v772
    %v776 = vtanh.pop %v775
    %777 = vmatpush.bf16.msra.mxu0 0
    %778 = vmatpush.bf16.msra.mxu0 0
    %779 = vmatpush.bf16.msra.mxu0 0
    %780 = vmatpush.bf16.msra.mxu0 0
    %781 = vmatpush.bf16.msra.mxu0 0
    %782 = vmatpush.bf16.msra.mxu0 0
    %783 = vmatpush.bf16.msra.mxu0 %v382
    %784 = vmatpush.bf16.msra.mxu0 %v381
    %785 = vmatmul.bf16.gmra.mxu0 %v760
    %v786 = vpop.f32.mrf.mxu0
    %v787 = vadd.f32 %v371, %v786
    %v788 = vpop.f32.mrf.mxu0
    %789 = vdwg.mxu0
    %v790 = vpack.c.bf16 %v679, %v679
    %v792 = vsel %vm226, %v790, 0
    %794 = vmatpush.bf16.msra.mxu0 0
    %795 = vmatpush.bf16.msra.mxu0 0
    %796 = vmatpush.bf16.msra.mxu0 0
    %797 = vmatpush.bf16.msra.mxu0 0
    %798 = vmatpush.bf16.msra.mxu0 0
    %799 = vmatpush.bf16.msra.mxu0 0
    %800 = vmatpush.bf16.msra.mxu0 %v407
    %801 = vmatpush.bf16.msra.mxu0 %v406
    %802 = vmatmul.bf16.gmra.mxu0 %v792
    %v803 = vpop.f32.mrf.mxu0
    %v804 = vadd.f32 0.0, %v803
    %v805 = vpop.f32.mrf.mxu0
    %806 = vdwg.mxu0
    %v807 = vadd.f32 %v787, %v804
    %v808 = vtanh.pop %v807
    %809 = vmatpush.bf16.msra.mxu0 0
    %810 = vmatpush.bf16.msra.mxu0 0
    %811 = vmatpush.bf16.msra.mxu0 0
    %812 = vmatpush.bf16.msra.mxu0 0
    %813 = vmatpush.bf16.msra.mxu0 0
    %814 = vmatpush.bf16.msra.mxu0 0
    %815 = vmatpush.bf16.msra.mxu0 %v520
    %816 = vmatpush.bf16.msra.mxu0 %v519
    %817 = vmatmul.bf16.gmra.mxu0 %v792
    %v818 = vpop.f32.mrf.mxu0
    %v819 = vadd.f32 %v509, %v818
    %v820 = vpop.f32.mrf.mxu0
    %821 = vdwg.mxu0
    %822 = vmatpush.bf16.msra.mxu0 0
    %823 = vmatpush.bf16.msra.mxu0 0
    %824 = vmatpush.bf16.msra.mxu0 0
    %825 = vmatpush.bf16.msra.mxu0 0
    %826 = vmatpush.bf16.msra.mxu0 0
    %827 = vmatpush.bf16.msra.mxu0 0
    %828 = vmatpush.bf16.msra.mxu0 %v545
    %829 = vmatpush.bf16.msra.mxu0 %v544
    %830 = vmatmul.bf16.gmra.mxu0 %v710
    %v831 = vpop.f32.mrf.mxu0
    %v832 = vadd.f32 0.0, %v831
    %v833 = vpop.f32.mrf.mxu0
    %834 = vdwg.mxu0
    %v835 = vadd.f32 %v819, %v832
    %v836 = vtanh.pop %v835
    %v837 = vpack.c.bf16 %v836, %v836
    %v839 = vsel %vm226, %v837, 0
    %841 = vmatpush.bf16.msra.mxu0 0
    %842 = vmatpush.bf16.msra.mxu0 0
    %843 = vmatpush.bf16.msra.mxu0 0
    %844 = vmatpush.bf16.msra.mxu0 0
    %845 = vmatpush.bf16.msra.mxu0 0
    %846 = vmatpush.bf16.msra.mxu0 0
    %847 = vmatpush.bf16.msra.mxu0 %v576
    %848 = vmatpush.bf16.msra.mxu0 %v575
    %849 = vmatmul.bf16.gmra.mxu0 %v839
    %v850 = vpop.f32.mrf.mxu0
    %v851 = vadd.f32 %v565, %v850
    %v852 = vpop.f32.mrf.mxu0
    %853 = vdwg.mxu0
    %854 = vst.msk [vmem:[%s15 + $0x10] sm:$0xff] %vm595, %v851
    %v855 = vpack.c.bf16 %v744, %v744
    %v857 = vsel %vm226, %v855, 0
    %859 = vmatpush.bf16.msra.mxu0 0
    %860 = vmatpush.bf16.msra.mxu0 0
    %861 = vmatpush.bf16.msra.mxu0 0
    %862 = vmatpush.bf16.msra.mxu0 0
    %863 = vmatpush.bf16.msra.mxu0 0
    %864 = vmatpush.bf16.msra.mxu0 0
    %865 = vmatpush.bf16.msra.mxu0 %v223
    %866 = vmatpush.bf16.msra.mxu0 %v222
    %867 = vmatmul.bf16.gmra.mxu0 %v857
    %v868 = vpop.f32.mrf.mxu0
    %v869 = vadd.f32 0.0, %v868
    %v870 = vpop.f32.mrf.mxu0
    %871 = vdwg.mxu0
    %v872 = vadd.f32 %v210, %v869
    %v873 = vtanh.pop %v872
    %874 = vmatpush.bf16.msra.mxu0 0
    %875 = vmatpush.bf16.msra.mxu0 0
    %876 = vmatpush.bf16.msra.mxu0 0
    %877 = vmatpush.bf16.msra.mxu0 0
    %878 = vmatpush.bf16.msra.mxu0 0
    %879 = vmatpush.bf16.msra.mxu0 0
    %880 = vmatpush.bf16.msra.mxu0 %v276
    %881 = vmatpush.bf16.msra.mxu0 %v275
    %882 = vmatmul.bf16.gmra.mxu0 %v857
    %v883 = vpop.f32.mrf.mxu0
    %v884 = vadd.f32 %v265, %v883
    %v885 = vpop.f32.mrf.mxu0
    %886 = vdwg.mxu0
    %v887 = vpack.c.bf16 %v776, %v776
    %v889 = vsel %vm226, %v887, 0
    %891 = vmatpush.bf16.msra.mxu0 0
    %892 = vmatpush.bf16.msra.mxu0 0
    %893 = vmatpush.bf16.msra.mxu0 0
    %894 = vmatpush.bf16.msra.mxu0 0
    %895 = vmatpush.bf16.msra.mxu0 0
    %896 = vmatpush.bf16.msra.mxu0 0
    %897 = vmatpush.bf16.msra.mxu0 %v301
    %898 = vmatpush.bf16.msra.mxu0 %v300
    %899 = vmatmul.bf16.gmra.mxu0 %v889
    %v900 = vpop.f32.mrf.mxu0
    %v901 = vadd.f32 0.0, %v900
    %v902 = vpop.f32.mrf.mxu0
    %903 = vdwg.mxu0
    %v904 = vadd.f32 %v884, %v901
    %v905 = vtanh.pop %v904
    %906 = vmatpush.bf16.msra.mxu0 0
    %907 = vmatpush.bf16.msra.mxu0 0
    %908 = vmatpush.bf16.msra.mxu0 0
    %909 = vmatpush.bf16.msra.mxu0 0
    %910 = vmatpush.bf16.msra.mxu0 0
    %911 = vmatpush.bf16.msra.mxu0 0
    %912 = vmatpush.bf16.msra.mxu0 %v382
    %913 = vmatpush.bf16.msra.mxu0 %v381
    %914 = vmatmul.bf16.gmra.mxu0 %v889
    %v915 = vpop.f32.mrf.mxu0
    %v916 = vadd.f32 %v371, %v915
    %v917 = vpop.f32.mrf.mxu0
    %918 = vdwg.mxu0
    %v919 = vpack.c.bf16 %v808, %v808
    %v921 = vsel %vm226, %v919, 0
    %923 = vmatpush.bf16.msra.mxu0 0
    %924 = vmatpush.bf16.msra.mxu0 0
    %925 = vmatpush.bf16.msra.mxu0 0
    %926 = vmatpush.bf16.msra.mxu0 0
    %927 = vmatpush.bf16.msra.mxu0 0
    %928 = vmatpush.bf16.msra.mxu0 0
    %929 = vmatpush.bf16.msra.mxu0 %v407
    %930 = vmatpush.bf16.msra.mxu0 %v406
    %931 = vmatmul.bf16.gmra.mxu0 %v921
    %v932 = vpop.f32.mrf.mxu0
    %v933 = vadd.f32 0.0, %v932
    %v934 = vpop.f32.mrf.mxu0
    %935 = vdwg.mxu0
    %v936 = vadd.f32 %v916, %v933
    %v937 = vtanh.pop %v936
    %938 = vmatpush.bf16.msra.mxu0 0
    %939 = vmatpush.bf16.msra.mxu0 0
    %940 = vmatpush.bf16.msra.mxu0 0
    %941 = vmatpush.bf16.msra.mxu0 0
    %942 = vmatpush.bf16.msra.mxu0 0
    %943 = vmatpush.bf16.msra.mxu0 0
    %944 = vmatpush.bf16.msra.mxu0 %v520
    %945 = vmatpush.bf16.msra.mxu0 %v519
    %946 = vmatmul.bf16.gmra.mxu0 %v921
    %v947 = vpop.f32.mrf.mxu0
    %v948 = vadd.f32 %v509, %v947
    %v949 = vpop.f32.mrf.mxu0
    %950 = vdwg.mxu0
    %951 = vmatpush.bf16.msra.mxu0 0
    %952 = vmatpush.bf16.msra.mxu0 0
    %953 = vmatpush.bf16.msra.mxu0 0
    %954 = vmatpush.bf16.msra.mxu0 0
    %955 = vmatpush.bf16.msra.mxu0 0
    %956 = vmatpush.bf16.msra.mxu0 0
    %957 = vmatpush.bf16.msra.mxu0 %v545
    %958 = vmatpush.bf16.msra.mxu0 %v544
    %959 = vmatmul.bf16.gmra.mxu0 %v839
    %v960 = vpop.f32.mrf.mxu0
    %v961 = vadd.f32 0.0, %v960
    %v962 = vpop.f32.mrf.mxu0
    %963 = vdwg.mxu0
    %v964 = vadd.f32 %v948, %v961
    %v965 = vtanh.pop %v964
    %v966 = vpack.c.bf16 %v965, %v965
    %v968 = vsel %vm226, %v966, 0
    %970 = vmatpush.bf16.msra.mxu0 0
    %971 = vmatpush.bf16.msra.mxu0 0
    %972 = vmatpush.bf16.msra.mxu0 0
    %973 = vmatpush.bf16.msra.mxu0 0
    %974 = vmatpush.bf16.msra.mxu0 0
    %975 = vmatpush.bf16.msra.mxu0 0
    %976 = vmatpush.bf16.msra.mxu0 %v576
    %977 = vmatpush.bf16.msra.mxu0 %v575
    %978 = vmatmul.bf16.gmra.mxu0 %v968
    %v979 = vpop.f32.mrf.mxu0
    %v980 = vadd.f32 %v565, %v979
    %v981 = vpop.f32.mrf.mxu0
    %982 = vdwg.mxu0
    %983 = vst.msk [vmem:[%s15 + $0x18] sm:$0xff] %vm595, %v980
    %v984 = vpack.c.bf16 %v873, %v873
    %v986 = vsel %vm226, %v984, 0
    %988 = vmatpush.bf16.msra.mxu0 0
    %989 = vmatpush.bf16.msra.mxu0 0
    %990 = vmatpush.bf16.msra.mxu0 0
    %991 = vmatpush.bf16.msra.mxu0 0
    %992 = vmatpush.bf16.msra.mxu0 0
    %993 = vmatpush.bf16.msra.mxu0 0
    %994 = vmatpush.bf16.msra.mxu0 %v223
    %995 = vmatpush.bf16.msra.mxu0 %v222
    %996 = vmatmul.bf16.gmra.mxu0 %v986
    %v997 = vpop.f32.mrf.mxu0
    %v998 = vadd.f32 0.0, %v997
    %v999 = vpop.f32.mrf.mxu0
    %1000 = vdwg.mxu0
    %v1001 = vadd.f32 %v212, %v998
    %v1002 = vtanh.pop %v1001
    %1003 = vmatpush.bf16.msra.mxu0 0
    %1004 = vmatpush.bf16.msra.mxu0 0
    %1005 = vmatpush.bf16.msra.mxu0 0
    %1006 = vmatpush.bf16.msra.mxu0 0
    %1007 = vmatpush.bf16.msra.mxu0 0
    %1008 = vmatpush.bf16.msra.mxu0 0
    %1009 = vmatpush.bf16.msra.mxu0 %v276
    %1010 = vmatpush.bf16.msra.mxu0 %v275
    %1011 = vmatmul.bf16.gmra.mxu0 %v986
    %v1012 = vpop.f32.mrf.mxu0
    %v1013 = vadd.f32 %v265, %v1012
    %v1014 = vpop.f32.mrf.mxu0
    %1015 = vdwg.mxu0
    %v1016 = vpack.c.bf16 %v905, %v905
    %v1018 = vsel %vm226, %v1016, 0
    %1020 = vmatpush.bf16.msra.mxu0 0
    %1021 = vmatpush.bf16.msra.mxu0 0
    %1022 = vmatpush.bf16.msra.mxu0 0
    %1023 = vmatpush.bf16.msra.mxu0 0
    %1024 = vmatpush.bf16.msra.mxu0 0
    %1025 = vmatpush.bf16.msra.mxu0 0
    %1026 = vmatpush.bf16.msra.mxu0 %v301
    %1027 = vmatpush.bf16.msra.mxu0 %v300
    %1028 = vmatmul.bf16.gmra.mxu0 %v1018
    %v1029 = vpop.f32.mrf.mxu0
    %v1030 = vadd.f32 0.0, %v1029
    %v1031 = vpop.f32.mrf.mxu0
    %1032 = vdwg.mxu0
    %v1033 = vadd.f32 %v1013, %v1030
    %v1034 = vtanh.pop %v1033
    %1035 = vmatpush.bf16.msra.mxu0 0
    %1036 = vmatpush.bf16.msra.mxu0 0
    %1037 = vmatpush.bf16.msra.mxu0 0
    %1038 = vmatpush.bf16.msra.mxu0 0
    %1039 = vmatpush.bf16.msra.mxu0 0
    %1040 = vmatpush.bf16.msra.mxu0 0
    %1041 = vmatpush.bf16.msra.mxu0 %v382
    %1042 = vmatpush.bf16.msra.mxu0 %v381
    %1043 = vmatmul.bf16.gmra.mxu0 %v1018
    %v1044 = vpop.f32.mrf.mxu0
    %v1045 = vadd.f32 %v371, %v1044
    %v1046 = vpop.f32.mrf.mxu0
    %1047 = vdwg.mxu0
    %v1048 = vpack.c.bf16 %v937, %v937
    %v1050 = vsel %vm226, %v1048, 0
    %1052 = vmatpush.bf16.msra.mxu0 0
    %1053 = vmatpush.bf16.msra.mxu0 0
    %1054 = vmatpush.bf16.msra.mxu0 0
    %1055 = vmatpush.bf16.msra.mxu0 0
    %1056 = vmatpush.bf16.msra.mxu0 0
    %1057 = vmatpush.bf16.msra.mxu0 0
    %1058 = vmatpush.bf16.msra.mxu0 %v407
    %1059 = vmatpush.bf16.msra.mxu0 %v406
    %1060 = vmatmul.bf16.gmra.mxu0 %v1050
    %v1061 = vpop.f32.mrf.mxu0
    %v1062 = vadd.f32 0.0, %v1061
    %v1063 = vpop.f32.mrf.mxu0
    %1064 = vdwg.mxu0
    %v1065 = vadd.f32 %v1045, %v1062
    %v1066 = vtanh.pop %v1065
    %1067 = vmatpush.bf16.msra.mxu0 0
    %1068 = vmatpush.bf16.msra.mxu0 0
    %1069 = vmatpush.bf16.msra.mxu0 0
    %1070 = vmatpush.bf16.msra.mxu0 0
    %1071 = vmatpush.bf16.msra.mxu0 0
    %1072 = vmatpush.bf16.msra.mxu0 0
    %1073 = vmatpush.bf16.msra.mxu0 %v520
    %1074 = vmatpush.bf16.msra.mxu0 %v519
    %1075 = vmatmul.bf16.gmra.mxu0 %v1050
    %v1076 = vpop.f32.mrf.mxu0
    %v1077 = vadd.f32 %v509, %v1076
    %v1078 = vpop.f32.mrf.mxu0
    %1079 = vdwg.mxu0
    %1080 = vmatpush.bf16.msra.mxu0 0
    %1081 = vmatpush.bf16.msra.mxu0 0
    %1082 = vmatpush.bf16.msra.mxu0 0
    %1083 = vmatpush.bf16.msra.mxu0 0
    %1084 = vmatpush.bf16.msra.mxu0 0
    %1085 = vmatpush.bf16.msra.mxu0 0
    %1086 = vmatpush.bf16.msra.mxu0 %v545
    %1087 = vmatpush.bf16.msra.mxu0 %v544
    %1088 = vmatmul.bf16.gmra.mxu0 %v968
    %v1089 = vpop.f32.mrf.mxu0
    %v1090 = vadd.f32 0.0, %v1089
    %v1091 = vpop.f32.mrf.mxu0
    %1092 = vdwg.mxu0
    %v1093 = vadd.f32 %v1077, %v1090
    %v1094 = vtanh.pop %v1093
    %v1095 = vpack.c.bf16 %v1094, %v1094
    %v1097 = vsel %vm226, %v1095, 0
    %1099 = vmatpush.bf16.msra.mxu0 0
    %1100 = vmatpush.bf16.msra.mxu0 0
    %1101 = vmatpush.bf16.msra.mxu0 0
    %1102 = vmatpush.bf16.msra.mxu0 0
    %1103 = vmatpush.bf16.msra.mxu0 0
    %1104 = vmatpush.bf16.msra.mxu0 0
    %1105 = vmatpush.bf16.msra.mxu0 %v576
    %1106 = vmatpush.bf16.msra.mxu0 %v575
    %1107 = vmatmul.bf16.gmra.mxu0 %v1097
    %v1108 = vpop.f32.mrf.mxu0
    %v1109 = vadd.f32 %v565, %v1108
    %v1110 = vpop.f32.mrf.mxu0
    %1111 = vdwg.mxu0
    %1112 = vst.msk [vmem:[%s15 + $0x20] sm:$0xff] %vm595, %v1109
    %v1113 = vpack.c.bf16 %v1002, %v1002
    %v1115 = vsel %vm226, %v1113, 0
    %1117 = vmatpush.bf16.msra.mxu0 0
    %1118 = vmatpush.bf16.msra.mxu0 0
    %1119 = vmatpush.bf16.msra.mxu0 0
    %1120 = vmatpush.bf16.msra.mxu0 0
    %1121 = vmatpush.bf16.msra.mxu0 0
    %1122 = vmatpush.bf16.msra.mxu0 0
    %1123 = vmatpush.bf16.msra.mxu0 %v276
    %1124 = vmatpush.bf16.msra.mxu0 %v275
    %1125 = vmatmul.bf16.gmra.mxu0 %v1115
    %v1126 = vpop.f32.mrf.mxu0
    %v1127 = vadd.f32 %v265, %v1126
    %v1128 = vpop.f32.mrf.mxu0
    %1129 = vdwg.mxu0
    %v1130 = vpack.c.bf16 %v1034, %v1034
    %v1132 = vsel %vm226, %v1130, 0
    %1134 = vmatpush.bf16.msra.mxu0 0
    %1135 = vmatpush.bf16.msra.mxu0 0
    %1136 = vmatpush.bf16.msra.mxu0 0
    %1137 = vmatpush.bf16.msra.mxu0 0
    %1138 = vmatpush.bf16.msra.mxu0 0
    %1139 = vmatpush.bf16.msra.mxu0 0
    %1140 = vmatpush.bf16.msra.mxu0 %v301
    %1141 = vmatpush.bf16.msra.mxu0 %v300
    %1142 = vmatmul.bf16.gmra.mxu0 %v1132
    %v1143 = vpop.f32.mrf.mxu0
    %v1144 = vadd.f32 0.0, %v1143
    %v1145 = vpop.f32.mrf.mxu0
    %1146 = vdwg.mxu0
    %v1147 = vadd.f32 %v1127, %v1144
    %v1148 = vtanh.pop %v1147
    %1149 = vmatpush.bf16.msra.mxu0 0
    %1150 = vmatpush.bf16.msra.mxu0 0
    %1151 = vmatpush.bf16.msra.mxu0 0
    %1152 = vmatpush.bf16.msra.mxu0 0
    %1153 = vmatpush.bf16.msra.mxu0 0
    %1154 = vmatpush.bf16.msra.mxu0 0
    %1155 = vmatpush.bf16.msra.mxu0 %v382
    %1156 = vmatpush.bf16.msra.mxu0 %v381
    %1157 = vmatmul.bf16.gmra.mxu0 %v1132
    %v1158 = vpop.f32.mrf.mxu0
    %v1159 = vadd.f32 %v371, %v1158
    %v1160 = vpop.f32.mrf.mxu0
    %1161 = vdwg.mxu0
    %v1162 = vpack.c.bf16 %v1066, %v1066
    %v1164 = vsel %vm226, %v1162, 0
    %1166 = vmatpush.bf16.msra.mxu0 0
    %1167 = vmatpush.bf16.msra.mxu0 0
    %1168 = vmatpush.bf16.msra.mxu0 0
    %1169 = vmatpush.bf16.msra.mxu0 0
    %1170 = vmatpush.bf16.msra.mxu0 0
    %1171 = vmatpush.bf16.msra.mxu0 0
    %1172 = vmatpush.bf16.msra.mxu0 %v407
    %1173 = vmatpush.bf16.msra.mxu0 %v406
    %1174 = vmatmul.bf16.gmra.mxu0 %v1164
    %v1175 = vpop.f32.mrf.mxu0
    %v1176 = vadd.f32 0.0, %v1175
    %v1177 = vpop.f32.mrf.mxu0
    %1178 = vdwg.mxu0
    %v1179 = vadd.f32 %v1159, %v1176
    %v1180 = vtanh.pop %v1179
    %1181 = vmatpush.bf16.msra.mxu0 0
    %1182 = vmatpush.bf16.msra.mxu0 0
    %1183 = vmatpush.bf16.msra.mxu0 0
    %1184 = vmatpush.bf16.msra.mxu0 0
    %1185 = vmatpush.bf16.msra.mxu0 0
    %1186 = vmatpush.bf16.msra.mxu0 0
    %1187 = vmatpush.bf16.msra.mxu0 %v520
    %1188 = vmatpush.bf16.msra.mxu0 %v519
    %1189 = vmatmul.bf16.gmra.mxu0 %v1164
    %v1190 = vpop.f32.mrf.mxu0
    %v1191 = vadd.f32 %v509, %v1190
    %v1192 = vpop.f32.mrf.mxu0
    %1193 = vdwg.mxu0
    %1194 = vmatpush.bf16.msra.mxu0 0
    %1195 = vmatpush.bf16.msra.mxu0 0
    %1196 = vmatpush.bf16.msra.mxu0 0
    %1197 = vmatpush.bf16.msra.mxu0 0
    %1198 = vmatpush.bf16.msra.mxu0 0
    %1199 = vmatpush.bf16.msra.mxu0 0
    %1200 = vmatpush.bf16.msra.mxu0 %v545
    %1201 = vmatpush.bf16.msra.mxu0 %v544
    %1202 = vmatmul.bf16.gmra.mxu0 %v1097
    %v1203 = vpop.f32.mrf.mxu0
    %v1204 = vadd.f32 0.0, %v1203
    %v1205 = vpop.f32.mrf.mxu0
    %1206 = vdwg.mxu0
    %v1207 = vadd.f32 %v1191, %v1204
    %v1208 = vtanh.pop %v1207
    %v1209 = vpack.c.bf16 %v1208, %v1208
    %v1211 = vsel %vm226, %v1209, 0
    %1213 = vmatpush.bf16.msra.mxu0 0
    %1214 = vmatpush.bf16.msra.mxu0 0
    %1215 = vmatpush.bf16.msra.mxu0 0
    %1216 = vmatpush.bf16.msra.mxu0 0
    %1217 = vmatpush.bf16.msra.mxu0 0
    %1218 = vmatpush.bf16.msra.mxu0 0
    %1219 = vmatpush.bf16.msra.mxu0 %v576
    %1220 = vmatpush.bf16.msra.mxu0 %v575
    %1221 = vmatmul.bf16.gmra.mxu0 %v1211
    %v1222 = vpop.f32.mrf.mxu0
    %v1223 = vadd.f32 %v565, %v1222
    %v1224 = vpop.f32.mrf.mxu0
    %1225 = vdwg.mxu0
    %1226 = vst.msk [vmem:[%s15 + $0x28] sm:$0xff] %vm595, %v1223
    %v1227 = vpack.c.bf16 %v1148, %v1148
    %v1229 = vsel %vm226, %v1227, 0
    %1231 = vmatpush.bf16.msra.mxu0 0
    %1232 = vmatpush.bf16.msra.mxu0 0
    %1233 = vmatpush.bf16.msra.mxu0 0
    %1234 = vmatpush.bf16.msra.mxu0 0
    %1235 = vmatpush.bf16.msra.mxu0 0
    %1236 = vmatpush.bf16.msra.mxu0 0
    %1237 = vmatpush.bf16.msra.mxu0 %v382
    %1238 = vmatpush.bf16.msra.mxu0 %v381
    %1239 = vmatmul.bf16.gmra.mxu0 %v1229
    %v1240 = vpop.f32.mrf.mxu0
    %v1241 = vadd.f32 %v371, %v1240
    %v1242 = vpop.f32.mrf.mxu0
    %1243 = vdwg.mxu0
    %v1244 = vpack.c.bf16 %v1180, %v1180
    %v1246 = vsel %vm226, %v1244, 0
    %1248 = vmatpush.bf16.msra.mxu0 0
    %1249 = vmatpush.bf16.msra.mxu0 0
    %1250 = vmatpush.bf16.msra.mxu0 0
    %1251 = vmatpush.bf16.msra.mxu0 0
    %1252 = vmatpush.bf16.msra.mxu0 0
    %1253 = vmatpush.bf16.msra.mxu0 0
    %1254 = vmatpush.bf16.msra.mxu0 %v407
    %1255 = vmatpush.bf16.msra.mxu0 %v406
    %1256 = vmatmul.bf16.gmra.mxu0 %v1246
    %v1257 = vpop.f32.mrf.mxu0
    %v1258 = vadd.f32 0.0, %v1257
    %v1259 = vpop.f32.mrf.mxu0
    %1260 = vdwg.mxu0
    %v1261 = vadd.f32 %v1241, %v1258
    %v1262 = vtanh.pop %v1261
    %1263 = vmatpush.bf16.msra.mxu0 0
    %1264 = vmatpush.bf16.msra.mxu0 0
    %1265 = vmatpush.bf16.msra.mxu0 0
    %1266 = vmatpush.bf16.msra.mxu0 0
    %1267 = vmatpush.bf16.msra.mxu0 0
    %1268 = vmatpush.bf16.msra.mxu0 0
    %1269 = vmatpush.bf16.msra.mxu0 %v520
    %1270 = vmatpush.bf16.msra.mxu0 %v519
    %1271 = vmatmul.bf16.gmra.mxu0 %v1246
    %v1272 = vpop.f32.mrf.mxu0
    %v1273 = vadd.f32 %v509, %v1272
    %v1274 = vpop.f32.mrf.mxu0
    %1275 = vdwg.mxu0
    %1276 = vmatpush.bf16.msra.mxu0 0
    %1277 = vmatpush.bf16.msra.mxu0 0
    %1278 = vmatpush.bf16.msra.mxu0 0
    %1279 = vmatpush.bf16.msra.mxu0 0
    %1280 = vmatpush.bf16.msra.mxu0 0
    %1281 = vmatpush.bf16.msra.mxu0 0
    %1282 = vmatpush.bf16.msra.mxu0 %v545
    %1283 = vmatpush.bf16.msra.mxu0 %v544
    %1284 = vmatmul.bf16.gmra.mxu0 %v1211
    %v1285 = vpop.f32.mrf.mxu0
    %v1286 = vadd.f32 0.0, %v1285
    %v1287 = vpop.f32.mrf.mxu0
    %1288 = vdwg.mxu0
    %v1289 = vadd.f32 %v1273, %v1286
    %v1290 = vtanh.pop %v1289
    %v1291 = vpack.c.bf16 %v1290, %v1290
    %v1293 = vsel %vm226, %v1291, 0
    %1295 = vmatpush.bf16.msra.mxu0 0
    %1296 = vmatpush.bf16.msra.mxu0 0
    %1297 = vmatpush.bf16.msra.mxu0 0
    %1298 = vmatpush.bf16.msra.mxu0 0
    %1299 = vmatpush.bf16.msra.mxu0 0
    %1300 = vmatpush.bf16.msra.mxu0 0
    %1301 = vmatpush.bf16.msra.mxu0 %v576
    %1302 = vmatpush.bf16.msra.mxu0 %v575
    %1303 = vmatmul.bf16.gmra.mxu0 %v1293
    %v1304 = vpop.f32.mrf.mxu0
    %v1305 = vadd.f32 %v565, %v1304
    %v1306 = vpop.f32.mrf.mxu0
    %1307 = vdwg.mxu0
    %1308 = vst.msk [vmem:[%s15 + $0x30] sm:$0xff] %vm595, %v1305
    %v1309 = vpack.c.bf16 %v1262, %v1262
    %v1311 = vsel %vm226, %v1309, 0
    %1313 = vmatpush.bf16.msra.mxu0 0
    %1314 = vmatpush.bf16.msra.mxu0 0
    %1315 = vmatpush.bf16.msra.mxu0 0
    %1316 = vmatpush.bf16.msra.mxu0 0
    %1317 = vmatpush.bf16.msra.mxu0 0
    %1318 = vmatpush.bf16.msra.mxu0 0
    %1319 = vmatpush.bf16.msra.mxu0 %v520
    %1320 = vmatpush.bf16.msra.mxu0 %v519
    %1321 = vmatmul.bf16.gmra.mxu0 %v1311
    %v1322 = vpop.f32.mrf.mxu0
    %v1323 = vadd.f32 %v509, %v1322
    %v1324 = vpop.f32.mrf.mxu0
    %1325 = vdwg.mxu0
    %1326 = vmatpush.bf16.msra.mxu0 0
    %1327 = vmatpush.bf16.msra.mxu0 0
    %1328 = vmatpush.bf16.msra.mxu0 0
    %1329 = vmatpush.bf16.msra.mxu0 0
    %1330 = vmatpush.bf16.msra.mxu0 0
    %1331 = vmatpush.bf16.msra.mxu0 0
    %1332 = vmatpush.bf16.msra.mxu0 %v545
    %1333 = vmatpush.bf16.msra.mxu0 %v544
    %1334 = vmatmul.bf16.gmra.mxu0 %v1293
    %v1335 = vpop.f32.mrf.mxu0
    %v1336 = vadd.f32 0.0, %v1335
    %v1337 = vpop.f32.mrf.mxu0
    %1338 = vdwg.mxu0
    %v1339 = vadd.f32 %v1323, %v1336
    %v1340 = vtanh.pop %v1339
    %v1341 = vpack.c.bf16 %v1340, %v1340
    %v1343 = vsel %vm226, %v1341, 0
    %1345 = vmatpush.bf16.msra.mxu0 0
    %1346 = vmatpush.bf16.msra.mxu0 0
    %1347 = vmatpush.bf16.msra.mxu0 0
    %1348 = vmatpush.bf16.msra.mxu0 0
    %1349 = vmatpush.bf16.msra.mxu0 0
    %1350 = vmatpush.bf16.msra.mxu0 0
    %1351 = vmatpush.bf16.msra.mxu0 %v576
    %1352 = vmatpush.bf16.msra.mxu0 %v575
    %1353 = vmatmul.bf16.gmra.mxu0 %v1343
    %v1354 = vpop.f32.mrf.mxu0
    %v1355 = vadd.f32 %v565, %v1354
    %v1356 = vpop.f32.mrf.mxu0
    %1357 = vdwg.mxu0
    %1358 = vst.msk [vmem:[%s15 + $0x38] sm:$0xff] %vm595, %v1355
    // Predicated region
    $region74: #{rnn_forward.1} parent=1 // pred_check
      _
    $region75: #{rnn_forward.1} parent=1 // pred_check_branch
      %1360 = sbr.rel (0) target = $region77
    $region76: #{rnn_forward.1} parent=1 // pred_region
      _
    $region77: #{rnn_forward.1} parent=1 // pred_fallthru
      _
    // Predicated region
    $region78: #{rnn_forward.1} parent=1 // pred_check
      _
    $region79: #{rnn_forward.1} parent=1 // pred_check_branch
      %1362 = sbr.rel (0) target = $region81
    $region80: #{rnn_forward.1} parent=1 // pred_region
      _
    $region81: #{rnn_forward.1} parent=1 // pred_fallthru
      _
    %1363 = vsyncpa [#allocation3], 1
    %1364 = vsyncpa [#allocation5], 1

</llo_original>
